<compile_context>
chip_gen: v7x
topology: tpu7x:2x2x1
jax: 0.10.0
libtpu: 0.0.40
codegen_flags: <defaults>
</compile_context>

<pallas_src>
import functools

import jax
import jax.numpy as jnp
from jax.experimental import pallas as pl
from jax.experimental.pallas import tpu as pltpu


OUT_ROWS = 16  # padded row count of the packed head output (>= num_classes + 1)


# ----------------------------------------------------------------------------
# The single fused Pallas kernel
# ----------------------------------------------------------------------------
def _fused_al_kernel(xt_ref, w1t_ref, b1_ref, w2t_ref, b2_ref, pool_ref,
                     q2_ref, fc1_wt_ref, fc1_b_ref, fc2_wt_ref, fc2_b_ref,
                     out_wt_ref, lp1_wt_ref, lp2_wt_ref, out_b_ref, o_ref):
    """Whole ActiveLearning forward, transposed layout (features x lanes).

    xt      : [C_in, B*S1]   input, spatial*batch on the lane axis
    f1      : [c1,  B*S1]    = relu(W1t @ xt + b1)
    f1_ds   : [c1,  B*S2]    = f1 @ pool      (block-diag 2x2 avg-pool matrix)
    f2      : [c2,  B*S2]    = relu(W2t @ f1_ds + b2)
    p1, p2  : [c,   B]       = f1_ds @ q2, f2 @ q2   (per-sample global means)
    h1, h2  : [fcw, B]       = relu(fc{1,2}_wt @ p{1,2} + b)
    o       : [OUT_ROWS, B]  rows 0:nc = base logits, row nc = loss prediction
    """
    f32 = jnp.float32

    # conv1 (1x1) + ReLU
    f1 = jnp.dot(w1t_ref[...], xt_ref[...], preferred_element_type=f32)
    f1 = jnp.maximum(f1 + b1_ref[...], 0.0)

    # 2x2 average pooling as an MXU matmul (block-diagonal over batch)
    f1_ds = jnp.dot(f1, pool_ref[...], preferred_element_type=f32)

    # conv2 (1x1) + ReLU
    f2 = jnp.dot(w2t_ref[...], f1_ds, preferred_element_type=f32)
    f2 = jnp.maximum(f2 + b2_ref[...], 0.0)

    # Global average pooling (per-sample means), still transposed: [c, B]
    p1 = jnp.dot(f1_ds, q2_ref[...], preferred_element_type=f32)
    p2 = jnp.dot(f2, q2_ref[...], preferred_element_type=f32)

    # Active-learning fc branches (transposed): [fcw, B]
    h1 = jnp.dot(fc1_wt_ref[...], p1, preferred_element_type=f32)
    h1 = jnp.maximum(h1 + fc1_b_ref[...], 0.0)
    h2 = jnp.dot(fc2_wt_ref[...], p2, preferred_element_type=f32)
    h2 = jnp.maximum(h2 + fc2_b_ref[...], 0.0)

    # Packed head: base classifier logits + loss prediction in one small slab.
    out = jnp.dot(out_wt_ref[...], p2, preferred_element_type=f32)
    out = out + jnp.dot(lp1_wt_ref[...], h1, preferred_element_type=f32)
    out = out + jnp.dot(lp2_wt_ref[...], h2, preferred_element_type=f32)
    o_ref[...] = (out + out_b_ref[...]).astype(o_ref.dtype)


# ----------------------------------------------------------------------------
# One-time weight packing (run OUTSIDE the jitted forward, once per update)
# ----------------------------------------------------------------------------
def pack_params(params, batch, height, width):
    base = params["base"]
    c1 = base["conv1_w"].shape[1]
    c2 = base["conv2_w"].shape[1]
    nc = base["head_w"].shape[1]
    fcw = params["fc_w"][0].shape[1]
    assert nc + 1 <= OUT_ROWS
    h2, w2 = height // 2, width // 2
    s1, s2 = height * width, h2 * w2

    # Transposed conv weights / column biases (kernel computes y = W^T @ x).
    w1t = base["conv1_w"].T
    b1 = base["conv1_b"].reshape(c1, 1)
    w2t = base["conv2_w"].T
    b2 = base["conv2_b"].reshape(c2, 1)

    # Block-diagonal (over batch) 2x2 average-pooling matrix: [B*S1, B*S2].
    bi = jnp.arange(batch)[:, None, None]
    hi = jnp.arange(height)[None, :, None]
    wi = jnp.arange(width)[None, None, :]
    cols = (bi * s2 + (hi // 2) * w2 + (wi // 2)).reshape(-1)
    pool = jnp.zeros((batch * s1, batch * s2), jnp.float32).at[
        jnp.arange(batch * s1), cols].set(0.25)

    # Per-sample global-mean matrix over the pooled map: [B*S2, B].
    rows2 = jnp.arange(batch * s2)
    q2 = jnp.zeros((batch * s2, batch), jnp.float32).at[
        rows2, rows2 // s2].set(1.0 / s2)

    # AL fc branches, transposed.
    fc1_wt = params["fc_w"][0].T
    fc1_b = params["fc_b"][0].reshape(fcw, 1)
    fc2_wt = params["fc_w"][1].T
    fc2_b = params["fc_b"][1].reshape(fcw, 1)

    # Packed head weights: rows 0:nc = base classifier, row nc = loss_pred.
    out_wt = jnp.zeros((OUT_ROWS, c2), jnp.float32).at[:nc, :].set(
        base["head_w"].T)
    lp_w = params["loss_pred_w"]                       # [2*fcw, 1]
    lp1_wt = jnp.zeros((OUT_ROWS, fcw), jnp.float32).at[nc, :].set(lp_w[:fcw, 0])
    lp2_wt = jnp.zeros((OUT_ROWS, fcw), jnp.float32).at[nc, :].set(lp_w[fcw:, 0])
    out_b = (jnp.zeros((OUT_ROWS, 1), jnp.float32)
             .at[:nc, 0].set(base["head_b"])
             .at[nc, 0].set(params["loss_pred_b"][0]))

    return dict(w1t=w1t, b1=b1, w2t=w2t, b2=b2, pool=pool, q2=q2,
                fc1_wt=fc1_wt, fc1_b=fc1_b, fc2_wt=fc2_wt, fc2_b=fc2_b,
                out_wt=out_wt, lp1_wt=lp1_wt, lp2_wt=lp2_wt, out_b=out_b)


# ----------------------------------------------------------------------------
# ActiveLearning forward (single pallas_call)
# ----------------------------------------------------------------------------
def active_learning_forward(packed, x, *, num_classes, detach_lp=False):
    # detach_lp only changes the backward pass in the original module; the
    # forward output is identical, so nothing to do here.
    # TODO(synk): wire a custom_vjp if detached loss-pred gradients are needed.
    del detach_lp
    B, C_in, H, W = x.shape

    # Tiny [B,C] swap so the (already channel-major) NCHW data becomes
    # [C_in, B*H*W] with batch*spatial on the lane axis.
    xt = jnp.transpose(x, (1, 0, 2, 3)).reshape(C_in, B * H * W)

    args = (xt, packed["w1t"], packed["b1"], packed["w2t"], packed["b2"],
            packed["pool"], packed["q2"],
            packed["fc1_wt"], packed["fc1_b"],
            packed["fc2_wt"], packed["fc2_b"],
            packed["out_wt"], packed["lp1_wt"], packed["lp2_wt"],
            packed["out_b"])

    out_slab_t = pl.pallas_call(
        _fused_al_kernel,
        out_shape=jax.ShapeDtypeStruct((OUT_ROWS, B), jnp.float32),
        grid=(1,),
        in_specs=[pl.BlockSpec(a.shape, lambda i: (0, 0)) for a in args],
        out_specs=pl.BlockSpec((OUT_ROWS, B), lambda i: (0, 0)),
        compiler_params=pltpu.CompilerParams(
            dimension_semantics=("arbitrary",)),
    )(*args)

    out = out_slab_t.T                               # [B, OUT_ROWS]
    out_p = out[:, :num_classes]
    loss_pred = out[:, num_classes:num_classes + 1]
    return out_p, loss_pred


# ----------------------------------------------------------------------------
# Pure-jnp reference (mirrors the PyTorch module math)
# ----------------------------------------------------------------------------
def avgpool2x2_nhwc(x):
    B, H, W, C = x.shape
    return x.reshape(B, H // 2, 2, W // 2, 2, C).mean(axis=(2, 4))


def reference_forward(params, x):
    hp = jax.lax.Precision.HIGHEST
    base = params["base"]
    xn = jnp.transpose(x, (0, 2, 3, 1))
    f1 = jax.nn.relu(jnp.einsum("bhwc,cd->bhwd", xn, base["conv1_w"],
                                precision=hp) + base["conv1_b"])
    f1_ds = avgpool2x2_nhwc(f1)
    f2 = jax.nn.relu(jnp.einsum("bhwc,cd->bhwd", f1_ds, base["conv2_w"],
                                precision=hp) + base["conv2_b"])
    p1 = f1.mean(axis=(1, 2))
    p2 = f2.mean(axis=(1, 2))
    out_p = jnp.dot(p2, base["head_w"], precision=hp) + base["head_b"]
    fc1 = jax.nn.relu(jnp.dot(p1, params["fc_w"][0], precision=hp)
                      + params["fc_b"][0])
    fc2 = jax.nn.relu(jnp.dot(p2, params["fc_w"][1], precision=hp)
                      + params["fc_b"][1])
    fc_cat = jnp.concatenate([fc1, fc2], axis=1)
    loss_pred = (jnp.dot(fc_cat, params["loss_pred_w"], precision=hp)
                 + params["loss_pred_b"])
    return out_p, loss_pred


# ----------------------------------------------------------------------------
# Deterministic parameter init (PyTorch nn.Linear-style uniform(-1/sqrt(fan_in)))
# ----------------------------------------------------------------------------
def _init_linear(key, fan_in, fan_out):
    kw, kb = jax.random.split(key)
    bound = 1.0 / jnp.sqrt(fan_in)
    w = jax.random.uniform(kw, (fan_in, fan_out), jnp.float32, -bound, bound)
    b = jax.random.uniform(kb, (fan_out,), jnp.float32, -bound, bound)
    return w, b


def init_params(key, in_channels, channel_counts, num_classes, fc_width):
    keys = jax.random.split(key, 6)
    conv1_w, conv1_b = _init_linear(keys[0], in_channels, channel_counts[0])
    conv2_w, conv2_b = _init_linear(keys[1], channel_counts[0], channel_counts[1])
    head_w, head_b = _init_linear(keys[2], channel_counts[1], num_classes)

    fc_keys = jax.random.split(keys[3], len(channel_counts))
    fc_w, fc_b = [], []
    for k, c in zip(fc_keys, channel_counts):
        w, b = _init_linear(k, c * 1 * 1, fc_width)  # global_avg_pool_size = 1
        fc_w.append(w)
        fc_b.append(b)

    lp_w, lp_b = _init_linear(keys[4], len(channel_counts) * fc_width, 1)

    return {
        "base": {
            "conv1_w": conv1_w, "conv1_b": conv1_b,
            "conv2_w": conv2_w, "conv2_b": conv2_b,
            "head_w": head_w, "head_b": head_b,
        },
        "fc_w": fc_w,
        "fc_b": fc_b,
        "loss_pred_w": lp_w,
        "loss_pred_b": lp_b,
    }


if __name__ == "__main__":
    B, C_in, H, W = 2, 4, 16, 16
    channel_counts = [8, 16]
    num_classes = 10
    fc_width = 128

    key = jax.random.PRNGKey(0)
    k_param, k_x = jax.random.split(key)
    params = init_params(k_param, C_in, channel_counts, num_classes, fc_width)
    x = jax.random.normal(k_x, (B, C_in, H, W), jnp.float32)

    # Pack / transpose weights and build pooling matrices ONCE (per update).
    packed = pack_params(params, B, H, W)

    fwd = jax.jit(functools.partial(active_learning_forward,
                                    num_classes=num_classes,
                                    detach_lp=False))
    out_p, loss_pred = fwd(packed, x)
    jax.block_until_ready((out_p, loss_pred))

    assert out_p.shape == (B, num_classes)
    assert loss_pred.shape == (B, 1)

    ref_out_p, ref_loss_pred = reference_forward(params, x)
    assert jnp.allclose(out_p, ref_out_p, rtol=1e-2, atol=1e-2)
    assert jnp.allclose(loss_pred, ref_loss_pred, rtol=1e-2, atol=1e-2)

    print("KERNEL_OK")
</pallas_src>

<mosaic_0001>
module attributes {stable_mosaic.version = 11 : i64} {
  func.func @_fused_al_kernel(%arg0: i32, %arg1: memref<4x512xf32, #tpu.memory_space<vmem>>, %arg2: memref<8x4xf32, #tpu.memory_space<vmem>>, %arg3: memref<8x1xf32, #tpu.memory_space<vmem>>, %arg4: memref<16x8xf32, #tpu.memory_space<vmem>>, %arg5: memref<16x1xf32, #tpu.memory_space<vmem>>, %arg6: memref<512x128xf32, #tpu.memory_space<vmem>>, %arg7: memref<128x2xf32, #tpu.memory_space<vmem>>, %arg8: memref<128x8xf32, #tpu.memory_space<vmem>>, %arg9: memref<128x1xf32, #tpu.memory_space<vmem>>, %arg10: memref<128x16xf32, #tpu.memory_space<vmem>>, %arg11: memref<128x1xf32, #tpu.memory_space<vmem>>, %arg12: memref<16x16xf32, #tpu.memory_space<vmem>>, %arg13: memref<16x128xf32, #tpu.memory_space<vmem>>, %arg14: memref<16x128xf32, #tpu.memory_space<vmem>>, %arg15: memref<16x1xf32, #tpu.memory_space<vmem>>, %arg16: memref<16x2xf32, #tpu.memory_space<vmem>>) attributes {dimension_semantics = [#tpu.dimension_semantics<arbitrary>], iteration_bounds = array<i64: 1>, scalar_prefetch = 0 : i64, scratch_operands = 0 : i64, tpu.core_type = #tpu.core_type<tc>, window_params = [{pipeline_mode = #tpu.pipeline_mode<synchronous>, transform_indices = @transform_0, window_bounds = array<i64: 4, 512>}, {pipeline_mode = #tpu.pipeline_mode<synchronous>, transform_indices = @transform_1, window_bounds = array<i64: 8, 4>}, {pipeline_mode = #tpu.pipeline_mode<synchronous>, transform_indices = @transform_2, window_bounds = array<i64: 8, 1>}, {pipeline_mode = #tpu.pipeline_mode<synchronous>, transform_indices = @transform_3, window_bounds = array<i64: 16, 8>}, {pipeline_mode = #tpu.pipeline_mode<synchronous>, transform_indices = @transform_4, window_bounds = array<i64: 16, 1>}, {pipeline_mode = #tpu.pipeline_mode<synchronous>, transform_indices = @transform_5, window_bounds = array<i64: 512, 128>}, {pipeline_mode = #tpu.pipeline_mode<synchronous>, transform_indices = @transform_6, window_bounds = array<i64: 128, 2>}, {pipeline_mode = #tpu.pipeline_mode<synchronous>, transform_indices = @transform_7, window_bounds = array<i64: 128, 8>}, {pipeline_mode = #tpu.pipeline_mode<synchronous>, transform_indices = @transform_8, window_bounds = array<i64: 128, 1>}, {pipeline_mode = #tpu.pipeline_mode<synchronous>, transform_indices = @transform_9, window_bounds = array<i64: 128, 16>}, {pipeline_mode = #tpu.pipeline_mode<synchronous>, transform_indices = @transform_10, window_bounds = array<i64: 128, 1>}, {pipeline_mode = #tpu.pipeline_mode<synchronous>, transform_indices = @transform_11, window_bounds = array<i64: 16, 16>}, {pipeline_mode = #tpu.pipeline_mode<synchronous>, transform_indices = @transform_12, window_bounds = array<i64: 16, 128>}, {pipeline_mode = #tpu.pipeline_mode<synchronous>, transform_indices = @transform_13, window_bounds = array<i64: 16, 128>}, {pipeline_mode = #tpu.pipeline_mode<synchronous>, transform_indices = @transform_14, window_bounds = array<i64: 16, 1>}, {pipeline_mode = #tpu.pipeline_mode<synchronous>, transform_indices = @transform_15, window_bounds = array<i64: 16, 2>}]} {
    %c0 = arith.constant 0 : index
    %c0_0 = arith.constant 0 : index
    %0 = vector.load %arg2[%c0, %c0_0] : memref<8x4xf32, #tpu.memory_space<vmem>>, vector<8x4xf32>
    %c0_1 = arith.constant 0 : index
    %c0_2 = arith.constant 0 : index
    %1 = vector.load %arg1[%c0_1, %c0_2] : memref<4x512xf32, #tpu.memory_space<vmem>>, vector<4x512xf32>
    %cst = arith.constant dense<0.000000e+00> : vector<8x512xf32>
    %2 = tpu.matmul %0, %1, %cst {dimension_numbers = #tpu.dot_dimension_numbers<[1], [0], [0], [1], [0, 0, 1, 1], [], []>} : vector<8x4xf32>, vector<4x512xf32>, vector<8x512xf32> -> vector<8x512xf32>
    %c0_3 = arith.constant 0 : index
    %c0_4 = arith.constant 0 : index
    %3 = vector.load %arg3[%c0_3, %c0_4] : memref<8x1xf32, #tpu.memory_space<vmem>>, vector<8x1xf32>
    %4 = vector.broadcast %3 : vector<8x1xf32> to vector<8x512xf32>
    %5 = arith.addf %2, %4 : vector<8x512xf32>
    %cst_5 = arith.constant 0.000000e+00 : f32
    %6 = vector.broadcast %cst_5 : f32 to vector<8x512xf32>
    %7 = arith.maximumf %5, %6 : vector<8x512xf32>
    %c0_6 = arith.constant 0 : index
    %c0_7 = arith.constant 0 : index
    %8 = vector.load %arg6[%c0_6, %c0_7] : memref<512x128xf32, #tpu.memory_space<vmem>>, vector<512x128xf32>
    %cst_8 = arith.constant dense<0.000000e+00> : vector<8x128xf32>
    %9 = tpu.matmul %7, %8, %cst_8 {dimension_numbers = #tpu.dot_dimension_numbers<[1], [0], [0], [1], [0, 0, 1, 1], [], []>} : vector<8x512xf32>, vector<512x128xf32>, vector<8x128xf32> -> vector<8x128xf32>
    %c0_9 = arith.constant 0 : index
    %c0_10 = arith.constant 0 : index
    %10 = vector.load %arg4[%c0_9, %c0_10] : memref<16x8xf32, #tpu.memory_space<vmem>>, vector<16x8xf32>
    %cst_11 = arith.constant dense<0.000000e+00> : vector<16x128xf32>
    %11 = tpu.matmul %10, %9, %cst_11 {dimension_numbers = #tpu.dot_dimension_numbers<[1], [0], [0], [1], [0, 0, 1, 1], [], []>} : vector<16x8xf32>, vector<8x128xf32>, vector<16x128xf32> -> vector<16x128xf32>
    %c0_12 = arith.constant 0 : index
    %c0_13 = arith.constant 0 : index
    %12 = vector.load %arg5[%c0_12, %c0_13] : memref<16x1xf32, #tpu.memory_space<vmem>>, vector<16x1xf32>
    %13 = vector.broadcast %12 : vector<16x1xf32> to vector<16x128xf32>
    %14 = arith.addf %11, %13 : vector<16x128xf32>
    %cst_14 = arith.constant 0.000000e+00 : f32
    %15 = vector.broadcast %cst_14 : f32 to vector<16x128xf32>
    %16 = arith.maximumf %14, %15 : vector<16x128xf32>
    %c0_15 = arith.constant 0 : index
    %c0_16 = arith.constant 0 : index
    %17 = vector.load %arg7[%c0_15, %c0_16] : memref<128x2xf32, #tpu.memory_space<vmem>>, vector<128x2xf32>
    %cst_17 = arith.constant dense<0.000000e+00> : vector<8x2xf32>
    %18 = tpu.matmul %9, %17, %cst_17 {dimension_numbers = #tpu.dot_dimension_numbers<[1], [0], [0], [1], [0, 0, 1, 1], [], []>} : vector<8x128xf32>, vector<128x2xf32>, vector<8x2xf32> -> vector<8x2xf32>
    %c0_18 = arith.constant 0 : index
    %c0_19 = arith.constant 0 : index
    %19 = vector.load %arg7[%c0_18, %c0_19] : memref<128x2xf32, #tpu.memory_space<vmem>>, vector<128x2xf32>
    %cst_20 = arith.constant dense<0.000000e+00> : vector<16x2xf32>
    %20 = tpu.matmul %16, %19, %cst_20 {dimension_numbers = #tpu.dot_dimension_numbers<[1], [0], [0], [1], [0, 0, 1, 1], [], []>} : vector<16x128xf32>, vector<128x2xf32>, vector<16x2xf32> -> vector<16x2xf32>
    %c0_21 = arith.constant 0 : index
    %c0_22 = arith.constant 0 : index
    %21 = vector.load %arg8[%c0_21, %c0_22] : memref<128x8xf32, #tpu.memory_space<vmem>>, vector<128x8xf32>
    %cst_23 = arith.constant dense<0.000000e+00> : vector<128x2xf32>
    %22 = tpu.matmul %21, %18, %cst_23 {dimension_numbers = #tpu.dot_dimension_numbers<[1], [0], [0], [1], [0, 0, 1, 1], [], []>} : vector<128x8xf32>, vector<8x2xf32>, vector<128x2xf32> -> vector<128x2xf32>
    %c0_24 = arith.constant 0 : index
    %c0_25 = arith.constant 0 : index
    %23 = vector.load %arg9[%c0_24, %c0_25] : memref<128x1xf32, #tpu.memory_space<vmem>>, vector<128x1xf32>
    %24 = vector.broadcast %23 : vector<128x1xf32> to vector<128x2xf32>
    %25 = arith.addf %22, %24 : vector<128x2xf32>
    %cst_26 = arith.constant 0.000000e+00 : f32
    %26 = vector.broadcast %cst_26 : f32 to vector<128x2xf32>
    %27 = arith.maximumf %25, %26 : vector<128x2xf32>
    %c0_27 = arith.constant 0 : index
    %c0_28 = arith.constant 0 : index
    %28 = vector.load %arg10[%c0_27, %c0_28] : memref<128x16xf32, #tpu.memory_space<vmem>>, vector<128x16xf32>
    %cst_29 = arith.constant dense<0.000000e+00> : vector<128x2xf32>
    %29 = tpu.matmul %28, %20, %cst_29 {dimension_numbers = #tpu.dot_dimension_numbers<[1], [0], [0], [1], [0, 0, 1, 1], [], []>} : vector<128x16xf32>, vector<16x2xf32>, vector<128x2xf32> -> vector<128x2xf32>
    %c0_30 = arith.constant 0 : index
    %c0_31 = arith.constant 0 : index
    %30 = vector.load %arg11[%c0_30, %c0_31] : memref<128x1xf32, #tpu.memory_space<vmem>>, vector<128x1xf32>
    %31 = vector.broadcast %30 : vector<128x1xf32> to vector<128x2xf32>
    %32 = arith.addf %29, %31 : vector<128x2xf32>
    %cst_32 = arith.constant 0.000000e+00 : f32
    %33 = vector.broadcast %cst_32 : f32 to vector<128x2xf32>
    %34 = arith.maximumf %32, %33 : vector<128x2xf32>
    %c0_33 = arith.constant 0 : index
    %c0_34 = arith.constant 0 : index
    %35 = vector.load %arg12[%c0_33, %c0_34] : memref<16x16xf32, #tpu.memory_space<vmem>>, vector<16x16xf32>
    %cst_35 = arith.constant dense<0.000000e+00> : vector<16x2xf32>
    %36 = tpu.matmul %35, %20, %cst_35 {dimension_numbers = #tpu.dot_dimension_numbers<[1], [0], [0], [1], [0, 0, 1, 1], [], []>} : vector<16x16xf32>, vector<16x2xf32>, vector<16x2xf32> -> vector<16x2xf32>
    %c0_36 = arith.constant 0 : index
    %c0_37 = arith.constant 0 : index
    %37 = vector.load %arg13[%c0_36, %c0_37] : memref<16x128xf32, #tpu.memory_space<vmem>>, vector<16x128xf32>
    %cst_38 = arith.constant dense<0.000000e+00> : vector<16x2xf32>
    %38 = tpu.matmul %37, %27, %cst_38 {dimension_numbers = #tpu.dot_dimension_numbers<[1], [0], [0], [1], [0, 0, 1, 1], [], []>} : vector<16x128xf32>, vector<128x2xf32>, vector<16x2xf32> -> vector<16x2xf32>
    %39 = arith.addf %36, %38 : vector<16x2xf32>
    %c0_39 = arith.constant 0 : index
    %c0_40 = arith.constant 0 : index
    %40 = vector.load %arg14[%c0_39, %c0_40] : memref<16x128xf32, #tpu.memory_space<vmem>>, vector<16x128xf32>
    %cst_41 = arith.constant dense<0.000000e+00> : vector<16x2xf32>
    %41 = tpu.matmul %40, %34, %cst_41 {dimension_numbers = #tpu.dot_dimension_numbers<[1], [0], [0], [1], [0, 0, 1, 1], [], []>} : vector<16x128xf32>, vector<128x2xf32>, vector<16x2xf32> -> vector<16x2xf32>
    %42 = arith.addf %39, %41 : vector<16x2xf32>
    %c0_42 = arith.constant 0 : index
    %c0_43 = arith.constant 0 : index
    %43 = vector.load %arg15[%c0_42, %c0_43] : memref<16x1xf32, #tpu.memory_space<vmem>>, vector<16x1xf32>
    %44 = vector.broadcast %43 : vector<16x1xf32> to vector<16x2xf32>
    %45 = arith.addf %42, %44 : vector<16x2xf32>
    %c0_44 = arith.constant 0 : index
    %c0_45 = arith.constant 0 : index
    %46 = vector.load %arg16[%c0_44, %c0_45] : memref<16x2xf32, #tpu.memory_space<vmem>>, vector<16x2xf32>
    tpu.vector_store %arg16[%c0_44, %c0_45], %45 {strides = array<i32>} : memref<16x2xf32, #tpu.memory_space<vmem>>, vector<16x2xf32>,
    return
  }
  func.func @transform_0(%arg0: i32) -> (i32, i32) {
    %c0_i32 = arith.constant 0 : i32
    %c0_i32_0 = arith.constant 0 : i32
    %c0_i32_1 = arith.constant 0 : i32
    return %c0_i32, %c0_i32_0 : i32, i32
  }
  func.func @transform_1(%arg0: i32) -> (i32, i32) {
    %c0_i32 = arith.constant 0 : i32
    %c0_i32_0 = arith.constant 0 : i32
    %c0_i32_1 = arith.constant 0 : i32
    return %c0_i32, %c0_i32_0 : i32, i32
  }
  func.func @transform_2(%arg0: i32) -> (i32, i32) {
    %c0_i32 = arith.constant 0 : i32
    %c0_i32_0 = arith.constant 0 : i32
    %c0_i32_1 = arith.constant 0 : i32
    return %c0_i32, %c0_i32_0 : i32, i32
  }
  func.func @transform_3(%arg0: i32) -> (i32, i32) {
    %c0_i32 = arith.constant 0 : i32
    %c0_i32_0 = arith.constant 0 : i32
    %c0_i32_1 = arith.constant 0 : i32
    return %c0_i32, %c0_i32_0 : i32, i32
  }
  func.func @transform_4(%arg0: i32) -> (i32, i32) {
    %c0_i32 = arith.constant 0 : i32
    %c0_i32_0 = arith.constant 0 : i32
    %c0_i32_1 = arith.constant 0 : i32
    return %c0_i32, %c0_i32_0 : i32, i32
  }
  func.func @transform_5(%arg0: i32) -> (i32, i32) {
    %c0_i32 = arith.constant 0 : i32
    %c0_i32_0 = arith.constant 0 : i32
    %c0_i32_1 = arith.constant 0 : i32
    return %c0_i32, %c0_i32_0 : i32, i32
  }
  func.func @transform_6(%arg0: i32) -> (i32, i32) {
    %c0_i32 = arith.constant 0 : i32
    %c0_i32_0 = arith.constant 0 : i32
    %c0_i32_1 = arith.constant 0 : i32
    return %c0_i32, %c0_i32_0 : i32, i32
  }
  func.func @transform_7(%arg0: i32) -> (i32, i32) {
    %c0_i32 = arith.constant 0 : i32
    %c0_i32_0 = arith.constant 0 : i32
    %c0_i32_1 = arith.constant 0 : i32
    return %c0_i32, %c0_i32_0 : i32, i32
  }
  func.func @transform_8(%arg0: i32) -> (i32, i32) {
    %c0_i32 = arith.constant 0 : i32
    %c0_i32_0 = arith.constant 0 : i32
    %c0_i32_1 = arith.constant 0 : i32
    return %c0_i32, %c0_i32_0 : i32, i32
  }
  func.func @transform_9(%arg0: i32) -> (i32, i32) {
    %c0_i32 = arith.constant 0 : i32
    %c0_i32_0 = arith.constant 0 : i32
    %c0_i32_1 = arith.constant 0 : i32
    return %c0_i32, %c0_i32_0 : i32, i32
  }
  func.func @transform_10(%arg0: i32) -> (i32, i32) {
    %c0_i32 = arith.constant 0 : i32
    %c0_i32_0 = arith.constant 0 : i32
    %c0_i32_1 = arith.constant 0 : i32
    return %c0_i32, %c0_i32_0 : i32, i32
  }
  func.func @transform_11(%arg0: i32) -> (i32, i32) {
    %c0_i32 = arith.constant 0 : i32
    %c0_i32_0 = arith.constant 0 : i32
    %c0_i32_1 = arith.constant 0 : i32
    return %c0_i32, %c0_i32_0 : i32, i32
  }
  func.func @transform_12(%arg0: i32) -> (i32, i32) {
    %c0_i32 = arith.constant 0 : i32
    %c0_i32_0 = arith.constant 0 : i32
    %c0_i32_1 = arith.constant 0 : i32
    return %c0_i32, %c0_i32_0 : i32, i32
  }
  func.func @transform_13(%arg0: i32) -> (i32, i32) {
    %c0_i32 = arith.constant 0 : i32
    %c0_i32_0 = arith.constant 0 : i32
    %c0_i32_1 = arith.constant 0 : i32
    return %c0_i32, %c0_i32_0 : i32, i32
  }
  func.func @transform_14(%arg0: i32) -> (i32, i32) {
    %c0_i32 = arith.constant 0 : i32
    %c0_i32_0 = arith.constant 0 : i32
    %c0_i32_1 = arith.constant 0 : i32
    return %c0_i32, %c0_i32_0 : i32, i32
  }
  func.func @transform_15(%arg0: i32) -> (i32, i32) {
    %c0_i32 = arith.constant 0 : i32
    %c0_i32_0 = arith.constant 0 : i32
    %c0_i32_1 = arith.constant 0 : i32
    return %c0_i32, %c0_i32_0 : i32, i32
  }
}

</mosaic_0001>

<llo_original>
// kernel: active_learning_forward.1
$region0: #{active_learning_forward.1}
  #allocation0 [shape = 'u32[]', space=smem, size = 0x4, offset = 0x4, fixed_abs, tag = 'smem constant byte address 0x4 - core index']
  #allocation1 [shape = 'u32[144,128]{1,0:T(1,128)}', space=vmem, size = 0x12000, scoped, tag = 'internal scratch']
  %s0 = inlined_call_operand.vmem [shape: f32[4,512], index: 0, kind: input, shape index: {}]
  %s1 = inlined_call_operand.vmem [shape: f32[8,4], index: 1, kind: input, shape index: {}]
  %s2 = inlined_call_operand.vmem [shape: f32[8,1], index: 2, kind: input, shape index: {}]
  %s3 = inlined_call_operand.vmem [shape: f32[16,8], index: 3, kind: input, shape index: {}]
  %s4 = inlined_call_operand.vmem [shape: f32[16,1], index: 4, kind: input, shape index: {}]
  %s5 = inlined_call_operand.vmem [shape: f32[512,128], index: 5, kind: input, shape index: {}]
  %s6 = inlined_call_operand.vmem [shape: f32[128,2], index: 6, kind: input, shape index: {}]
  %s7 = inlined_call_operand.vmem [shape: f32[128,8], index: 7, kind: input, shape index: {}]
  %s8 = inlined_call_operand.vmem [shape: f32[128,1], index: 8, kind: input, shape index: {}]
  %s9 = inlined_call_operand.vmem [shape: f32[128,16], index: 9, kind: input, shape index: {}]
  %s10 = inlined_call_operand.vmem [shape: f32[128,1], index: 10, kind: input, shape index: {}]
  %s11 = inlined_call_operand.vmem [shape: f32[16,16], index: 11, kind: input, shape index: {}]
  %s12 = inlined_call_operand.vmem [shape: f32[16,128], index: 12, kind: input, shape index: {}]
  %s13 = inlined_call_operand.vmem [shape: f32[16,128], index: 13, kind: input, shape index: {}]
  %s14 = inlined_call_operand.vmem [shape: f32[16,1], index: 14, kind: input, shape index: {}]
  %s15 = inlined_call_operand.vmem [shape: f32[16,2], index: 15, kind: output, shape index: {}]
  %s16 = sld [smem:[#allocation0]]
  $region70: #{active_learning_forward.1} parent=0
    _
  %s18 = ssub.s32 1, %s16
  %s19 = scalar_select 0, %s18, %s16
  // Predicated region
  $region2: #{active_learning_forward.1} parent=0 // pred_check
    _
  $region3: #{active_learning_forward.1} parent=0 // pred_check_branch
    %21 = sbr.rel (0) target = $region5
  $region4: #{active_learning_forward.1} parent=0 // pred_region
    _
  $region5: #{active_learning_forward.1} parent=0 // pred_fallthru
    _
  // Predicated region
  $region6: #{active_learning_forward.1} parent=0 // pred_check
    _
  $region7: #{active_learning_forward.1} parent=0 // pred_check_branch
    %23 = sbr.rel (0) target = $region9
  $region8: #{active_learning_forward.1} parent=0 // pred_region
    _
  $region9: #{active_learning_forward.1} parent=0 // pred_fallthru
    _
  // Predicated region
  $region10: #{active_learning_forward.1} parent=0 // pred_check
    _
  $region11: #{active_learning_forward.1} parent=0 // pred_check_branch
    %25 = sbr.rel (0) target = $region13
  $region12: #{active_learning_forward.1} parent=0 // pred_region
    _
  $region13: #{active_learning_forward.1} parent=0 // pred_fallthru
    _
  // Predicated region
  $region14: #{active_learning_forward.1} parent=0 // pred_check
    _
  $region15: #{active_learning_forward.1} parent=0 // pred_check_branch
    %27 = sbr.rel (0) target = $region17
  $region16: #{active_learning_forward.1} parent=0 // pred_region
    _
  $region17: #{active_learning_forward.1} parent=0 // pred_fallthru
    _
  // Predicated region
  $region18: #{active_learning_forward.1} parent=0 // pred_check
    _
  $region19: #{active_learning_forward.1} parent=0 // pred_check_branch
    %29 = sbr.rel (0) target = $region21
  $region20: #{active_learning_forward.1} parent=0 // pred_region
    _
  $region21: #{active_learning_forward.1} parent=0 // pred_fallthru
    _
  // Predicated region
  $region22: #{active_learning_forward.1} parent=0 // pred_check
    _
  $region23: #{active_learning_forward.1} parent=0 // pred_check_branch
    %31 = sbr.rel (0) target = $region25
  $region24: #{active_learning_forward.1} parent=0 // pred_region
    _
  $region25: #{active_learning_forward.1} parent=0 // pred_fallthru
    _
  // Predicated region
  $region26: #{active_learning_forward.1} parent=0 // pred_check
    _
  $region27: #{active_learning_forward.1} parent=0 // pred_check_branch
    %33 = sbr.rel (0) target = $region29
  $region28: #{active_learning_forward.1} parent=0 // pred_region
    _
  $region29: #{active_learning_forward.1} parent=0 // pred_fallthru
    _
  // Predicated region
  $region30: #{active_learning_forward.1} parent=0 // pred_check
    _
  $region31: #{active_learning_forward.1} parent=0 // pred_check_branch
    %35 = sbr.rel (0) target = $region33
  $region32: #{active_learning_forward.1} parent=0 // pred_region
    _
  $region33: #{active_learning_forward.1} parent=0 // pred_fallthru
    _
  // Predicated region
  $region34: #{active_learning_forward.1} parent=0 // pred_check
    _
  $region35: #{active_learning_forward.1} parent=0 // pred_check_branch
    %37 = sbr.rel (0) target = $region37
  $region36: #{active_learning_forward.1} parent=0 // pred_region
    _
  $region37: #{active_learning_forward.1} parent=0 // pred_fallthru
    _
  // Predicated region
  $region38: #{active_learning_forward.1} parent=0 // pred_check
    _
  $region39: #{active_learning_forward.1} parent=0 // pred_check_branch
    %39 = sbr.rel (0) target = $region41
  $region40: #{active_learning_forward.1} parent=0 // pred_region
    _
  $region41: #{active_learning_forward.1} parent=0 // pred_fallthru
    _
  // Predicated region
  $region42: #{active_learning_forward.1} parent=0 // pred_check
    _
  $region43: #{active_learning_forward.1} parent=0 // pred_check_branch
    %41 = sbr.rel (0) target = $region45
  $region44: #{active_learning_forward.1} parent=0 // pred_region
    _
  $region45: #{active_learning_forward.1} parent=0 // pred_fallthru
    _
  // Predicated region
  $region46: #{active_learning_forward.1} parent=0 // pred_check
    _
  $region47: #{active_learning_forward.1} parent=0 // pred_check_branch
    %43 = sbr.rel (0) target = $region49
  $region48: #{active_learning_forward.1} parent=0 // pred_region
    _
  $region49: #{active_learning_forward.1} parent=0 // pred_fallthru
    _
  // Predicated region
  $region50: #{active_learning_forward.1} parent=0 // pred_check
    _
  $region51: #{active_learning_forward.1} parent=0 // pred_check_branch
    %45 = sbr.rel (0) target = $region53
  $region52: #{active_learning_forward.1} parent=0 // pred_region
    _
  $region53: #{active_learning_forward.1} parent=0 // pred_fallthru
    _
  // Predicated region
  $region54: #{active_learning_forward.1} parent=0 // pred_check
    _
  $region55: #{active_learning_forward.1} parent=0 // pred_check_branch
    %47 = sbr.rel (0) target = $region57
  $region56: #{active_learning_forward.1} parent=0 // pred_region
    _
  $region57: #{active_learning_forward.1} parent=0 // pred_fallthru
    _
  // Predicated region
  $region58: #{active_learning_forward.1} parent=0 // pred_check
    _
  $region59: #{active_learning_forward.1} parent=0 // pred_check_branch
    %49 = sbr.rel (0) target = $region61
  $region60: #{active_learning_forward.1} parent=0 // pred_region
    _
  $region61: #{active_learning_forward.1} parent=0 // pred_fallthru
    _
  %v50 = vld [vmem:[%s1] sm:$0xff]
  %v51 = vld [vmem:[%s0] sm:$0xff]
  %v52 = vld [vmem:[%s0 + $0x8] sm:$0xff]
  %v53 = vld [vmem:[%s2] sm:$0xff]
  %55 = vset.pattern.permute.xlu0 0
  %56 = vperm.xlu0 %55, %v53
  %v57 = vpop.permute.xlu0 %56
  %v61 = vcombine.high %v51, %v51
  %v62 = vcombine.high %v52, %v52
  %vm63 = vcmask 31744
  %v65 = vsel %vm63, %v50, 0
  %vm67 = vcmask 1043456
  %v68 = vsel %vm67, %v51, 0
  %v70 = vsel %vm67, %v61, 0
  %v72 = vsel %vm67, %v52, 0
  %v74 = vsel %vm67, %v62, 0
  %76 = vmatprep.subr.mxu0 %v70
  %77 = vmatpush1.msra.mxu0 %v68
  %78 = vmatprep.subr.mxu0 0.0
  %79 = vmatpush1.msra.mxu0 0.0
  %80 = vmatprep.subr.mxu0 0.0
  %81 = vmatpush1.msra.mxu0 0.0
  %82 = vmatprep.subr.mxu0 0.0
  %83 = vmatpush1.msra.mxu0 0.0
  %84 = vmatprep.subr.mxu0 0.0
  %85 = vmatpush1.msra.mxu0 0.0
  %86 = vmatprep.subr.mxu0 0.0
  %87 = vmatpush1.msra.mxu0 0.0
  %88 = vmatprep.subr.mxu0 0.0
  %89 = vmatpush1.msra.mxu0 0.0
  %90 = vmatprep.subr.mxu0 0.0
  %91 = vmatpush1.msra.mxu0 0.0
  %92 = vmatprep.subr.mxu0 0.0
  %93 = vmatpush1.msra.mxu0 0.0
  %94 = vmatprep.subr.mxu0 0.0
  %95 = vmatpush1.msra.mxu0 0.0
  %96 = vmatprep.subr.mxu0 0.0
  %97 = vmatpush1.msra.mxu0 0.0
  %98 = vmatprep.subr.mxu0 0.0
  %99 = vmatpush1.msra.mxu0 0.0
  %100 = vmatprep.subr.mxu0 0.0
  %101 = vmatpush1.msra.mxu0 0.0
  %102 = vmatprep.subr.mxu0 0.0
  %103 = vmatpush1.msra.mxu0 0.0
  %104 = vmatprep.subr.mxu0 0.0
  %105 = vmatpush1.msra.mxu0 0.0
  %106 = vmatprep.subr.mxu0 0.0
  %107 = vmatpush1.msra.mxu0 0.0
  %108 = vmatprep.subr.mxu0 0.0
  %109 = vmatpush1.msra.mxu0 0.0
  %110 = vmatprep.subr.mxu0 0.0
  %111 = vmatpush1.msra.mxu0 0.0
  %112 = vmatprep.subr.mxu0 0.0
  %113 = vmatpush1.msra.mxu0 0.0
  %114 = vmatprep.subr.mxu0 0.0
  %115 = vmatpush1.msra.mxu0 0.0
  %116 = vmatprep.subr.mxu0 0.0
  %117 = vmatpush1.msra.mxu0 0.0
  %118 = vmatprep.subr.mxu0 0.0
  %119 = vmatpush1.msra.mxu0 0.0
  %120 = vmatprep.subr.mxu0 0.0
  %121 = vmatpush1.msra.mxu0 0.0
  %122 = vmatprep.subr.mxu0 0.0
  %123 = vmatpush1.msra.mxu0 0.0
  %124 = vmatprep.subr.mxu0 0.0
  %125 = vmatpush1.msra.mxu0 0.0
  %126 = vmatprep.subr.mxu0 0.0
  %127 = vmatpush1.msra.mxu0 0.0
  %128 = vmatprep.subr.mxu0 0.0
  %129 = vmatpush1.msra.mxu0 0.0
  %130 = vmatprep.subr.mxu0 0.0
  %131 = vmatpush1.msra.mxu0 0.0
  %132 = vmatprep.subr.mxu0 0.0
  %133 = vmatpush1.msra.mxu0 0.0
  %134 = vmatprep.subr.mxu0 0.0
  %135 = vmatpush1.msra.mxu0 0.0
  %136 = vmatprep.subr.mxu0 0.0
  %137 = vmatpush1.msra.mxu0 0.0
  %138 = vmatprep.subr.mxu0 0.0
  %139 = vmatpush1.msra.mxu0 0.0
  %140 = vmatprep.mubr.f32.mxu0 0.0
  %141 = vmatmul.mubr.f32.gmra.mrb[0].mxu0 %v65
  %v142 = vpop.f32.mrb[0].mxu0
  %v143 = vadd.f32 %v57, %v142
  %v144 = vpop.f32.mrb[0].mxu0
  %v145 = vadd.f32 %v57, %v144
  %146 = vdwg.mxu0
  %147 = vmatprep.subr.mxu0 %v74
  %148 = vmatpush1.msra.mxu0 %v72
  %149 = vmatprep.subr.mxu0 0.0
  %150 = vmatpush1.msra.mxu0 0.0
  %151 = vmatprep.subr.mxu0 0.0
  %152 = vmatpush1.msra.mxu0 0.0
  %153 = vmatprep.subr.mxu0 0.0
  %154 = vmatpush1.msra.mxu0 0.0
  %155 = vmatprep.subr.mxu0 0.0
  %156 = vmatpush1.msra.mxu0 0.0
  %157 = vmatprep.subr.mxu0 0.0
  %158 = vmatpush1.msra.mxu0 0.0
  %159 = vmatprep.subr.mxu0 0.0
  %160 = vmatpush1.msra.mxu0 0.0
  %161 = vmatprep.subr.mxu0 0.0
  %162 = vmatpush1.msra.mxu0 0.0
  %163 = vmatprep.subr.mxu0 0.0
  %164 = vmatpush1.msra.mxu0 0.0
  %165 = vmatprep.subr.mxu0 0.0
  %166 = vmatpush1.msra.mxu0 0.0
  %167 = vmatprep.subr.mxu0 0.0
  %168 = vmatpush1.msra.mxu0 0.0
  %169 = vmatprep.subr.mxu0 0.0
  %170 = vmatpush1.msra.mxu0 0.0
  %171 = vmatprep.subr.mxu0 0.0
  %172 = vmatpush1.msra.mxu0 0.0
  %173 = vmatprep.subr.mxu0 0.0
  %174 = vmatpush1.msra.mxu0 0.0
  %175 = vmatprep.subr.mxu0 0.0
  %176 = vmatpush1.msra.mxu0 0.0
  %177 = vmatprep.subr.mxu0 0.0
  %178 = vmatpush1.msra.mxu0 0.0
  %179 = vmatprep.subr.mxu0 0.0
  %180 = vmatpush1.msra.mxu0 0.0
  %181 = vmatprep.subr.mxu0 0.0
  %182 = vmatpush1.msra.mxu0 0.0
  %183 = vmatprep.subr.mxu0 0.0
  %184 = vmatpush1.msra.mxu0 0.0
  %185 = vmatprep.subr.mxu0 0.0
  %186 = vmatpush1.msra.mxu0 0.0
  %187 = vmatprep.subr.mxu0 0.0
  %188 = vmatpush1.msra.mxu0 0.0
  %189 = vmatprep.subr.mxu0 0.0
  %190 = vmatpush1.msra.mxu0 0.0
  %191 = vmatprep.subr.mxu0 0.0
  %192 = vmatpush1.msra.mxu0 0.0
  %193 = vmatprep.subr.mxu0 0.0
  %194 = vmatpush1.msra.mxu0 0.0
  %195 = vmatprep.subr.mxu0 0.0
  %196 = vmatpush1.msra.mxu0 0.0
  %197 = vmatprep.subr.mxu0 0.0
  %198 = vmatpush1.msra.mxu0 0.0
  %199 = vmatprep.subr.mxu0 0.0
  %200 = vmatpush1.msra.mxu0 0.0
  %201 = vmatprep.subr.mxu0 0.0
  %202 = vmatpush1.msra.mxu0 0.0
  %203 = vmatprep.subr.mxu0 0.0
  %204 = vmatpush1.msra.mxu0 0.0
  %205 = vmatprep.subr.mxu0 0.0
  %206 = vmatpush1.msra.mxu0 0.0
  %207 = vmatprep.subr.mxu0 0.0
  %208 = vmatpush1.msra.mxu0 0.0
  %209 = vmatprep.subr.mxu0 0.0
  %210 = vmatpush1.msra.mxu0 0.0
  %211 = vmatprep.mubr.f32.mxu0 0.0
  %212 = vmatmul.mubr.f32.gmra.mrb[0].mxu0 %v65
  %v213 = vpop.f32.mrb[0].mxu0
  %v214 = vadd.f32 %v57, %v213
  %v215 = vpop.f32.mrb[0].mxu0
  %v216 = vadd.f32 %v57, %v215
  %217 = vdwg.mxu0
  %v218 = vmax.f32 %v143, 0.0
  %v219 = vmax.f32 %v145, 0.0
  %v220 = vmax.f32 %v214, 0.0
  %v221 = vmax.f32 %v216, 0.0
  %v222 = vld [vmem:[%s5] sm:$0xff]
  %v223 = vld [vmem:[%s5 + $0x8] sm:$0xff]
  %v224 = vld [vmem:[%s5 + $0x10] sm:$0xff]
  %v225 = vld [vmem:[%s5 + $0x18] sm:$0xff]
  %v226 = vld [vmem:[%s5 + $0x20] sm:$0xff]
  %v227 = vld [vmem:[%s5 + $0x28] sm:$0xff]
  %v228 = vld [vmem:[%s5 + $0x30] sm:$0xff]
  %v229 = vld [vmem:[%s5 + $0x38] sm:$0xff]
  %v230 = vld [vmem:[%s5 + $0x40] sm:$0xff]
  %v231 = vld [vmem:[%s5 + $0x48] sm:$0xff]
  %v232 = vld [vmem:[%s5 + $0x50] sm:$0xff]
  %v233 = vld [vmem:[%s5 + $0x58] sm:$0xff]
  %v234 = vld [vmem:[%s5 + $0x60] sm:$0xff]
  %v235 = vld [vmem:[%s5 + $0x68] sm:$0xff]
  %v236 = vld [vmem:[%s5 + $0x70] sm:$0xff]
  %v237 = vld [vmem:[%s5 + $0x78] sm:$0xff]
  %v238 = vld [vmem:[%s5 + $0x80] sm:$0xff]
  %v239 = vld [vmem:[%s5 + $0x88] sm:$0xff]
  %v240 = vld [vmem:[%s5 + $0x90] sm:$0xff]
  %v241 = vld [vmem:[%s5 + $0x98] sm:$0xff]
  %v242 = vld [vmem:[%s5 + $0xa0] sm:$0xff]
  %v243 = vld [vmem:[%s5 + $0xa8] sm:$0xff]
  %v244 = vld [vmem:[%s5 + $0xb0] sm:$0xff]
  %v245 = vld [vmem:[%s5 + $0xb8] sm:$0xff]
  %v246 = vld [vmem:[%s5 + $0xc0] sm:$0xff]
  %v247 = vld [vmem:[%s5 + $0xc8] sm:$0xff]
  %v248 = vld [vmem:[%s5 + $0xd0] sm:$0xff]
  %v249 = vld [vmem:[%s5 + $0xd8] sm:$0xff]
  %v250 = vld [vmem:[%s5 + $0xe0] sm:$0xff]
  %v251 = vld [vmem:[%s5 + $0xe8] sm:$0xff]
  %v252 = vld [vmem:[%s5 + $0xf0] sm:$0xff]
  %v253 = vld [vmem:[%s5 + $0xf8] sm:$0xff]
  %v254 = vld [vmem:[%s5 + $0x100] sm:$0xff]
  %v255 = vld [vmem:[%s5 + $0x108] sm:$0xff]
  %v256 = vld [vmem:[%s5 + $0x110] sm:$0xff]
  %v257 = vld [vmem:[%s5 + $0x118] sm:$0xff]
  %v258 = vld [vmem:[%s5 + $0x120] sm:$0xff]
  %v259 = vld [vmem:[%s5 + $0x128] sm:$0xff]
  %v260 = vld [vmem:[%s5 + $0x130] sm:$0xff]
  %v261 = vld [vmem:[%s5 + $0x138] sm:$0xff]
  %v262 = vld [vmem:[%s5 + $0x140] sm:$0xff]
  %v263 = vld [vmem:[%s5 + $0x148] sm:$0xff]
  %v264 = vld [vmem:[%s5 + $0x150] sm:$0xff]
  %v265 = vld [vmem:[%s5 + $0x158] sm:$0xff]
  %v266 = vld [vmem:[%s5 + $0x160] sm:$0xff]
  %v267 = vld [vmem:[%s5 + $0x168] sm:$0xff]
  %v268 = vld [vmem:[%s5 + $0x170] sm:$0xff]
  %v269 = vld [vmem:[%s5 + $0x178] sm:$0xff]
  %v270 = vld [vmem:[%s5 + $0x180] sm:$0xff]
  %v271 = vld [vmem:[%s5 + $0x188] sm:$0xff]
  %v272 = vld [vmem:[%s5 + $0x190] sm:$0xff]
  %v273 = vld [vmem:[%s5 + $0x198] sm:$0xff]
  %v274 = vld [vmem:[%s5 + $0x1a0] sm:$0xff]
  %v275 = vld [vmem:[%s5 + $0x1a8] sm:$0xff]
  %v276 = vld [vmem:[%s5 + $0x1b0] sm:$0xff]
  %v277 = vld [vmem:[%s5 + $0x1b8] sm:$0xff]
  %v278 = vld [vmem:[%s5 + $0x1c0] sm:$0xff]
  %v279 = vld [vmem:[%s5 + $0x1c8] sm:$0xff]
  %v280 = vld [vmem:[%s5 + $0x1d0] sm:$0xff]
  %v281 = vld [vmem:[%s5 + $0x1d8] sm:$0xff]
  %v282 = vld [vmem:[%s5 + $0x1e0] sm:$0xff]
  %v283 = vld [vmem:[%s5 + $0x1e8] sm:$0xff]
  %v284 = vld [vmem:[%s5 + $0x1f0] sm:$0xff]
  %v285 = vld [vmem:[%s5 + $0x1f8] sm:$0xff]
  %286 = vmatprep.subr.mxu0 0.0
  %287 = vmatpush1.msra.mxu0 %v222
  %288 = vmatprep.subr.mxu0 0.0
  %289 = vmatpush1.msra.mxu0 %v223
  %290 = vmatprep.subr.mxu0 0.0
  %291 = vmatpush1.msra.mxu0 %v224
  %292 = vmatprep.subr.mxu0 0.0
  %293 = vmatpush1.msra.mxu0 %v225
  %294 = vmatprep.subr.mxu0 0.0
  %295 = vmatpush1.msra.mxu0 %v226
  %296 = vmatprep.subr.mxu0 0.0
  %297 = vmatpush1.msra.mxu0 %v227
  %298 = vmatprep.subr.mxu0 0.0
  %299 = vmatpush1.msra.mxu0 %v228
  %300 = vmatprep.subr.mxu0 0.0
  %301 = vmatpush1.msra.mxu0 %v229
  %302 = vmatprep.subr.mxu0 0.0
  %303 = vmatpush1.msra.mxu0 %v230
  %304 = vmatprep.subr.mxu0 0.0
  %305 = vmatpush1.msra.mxu0 %v231
  %306 = vmatprep.subr.mxu0 0.0
  %307 = vmatpush1.msra.mxu0 %v232
  %308 = vmatprep.subr.mxu0 0.0
  %309 = vmatpush1.msra.mxu0 %v233
  %310 = vmatprep.subr.mxu0 0.0
  %311 = vmatpush1.msra.mxu0 %v234
  %312 = vmatprep.subr.mxu0 0.0
  %313 = vmatpush1.msra.mxu0 %v235
  %314 = vmatprep.subr.mxu0 0.0
  %315 = vmatpush1.msra.mxu0 %v236
  %316 = vmatprep.subr.mxu0 0.0
  %317 = vmatpush1.msra.mxu0 %v237
  %318 = vmatprep.subr.mxu0 0.0
  %319 = vmatpush1.msra.mxu0 %v238
  %320 = vmatprep.subr.mxu0 0.0
  %321 = vmatpush1.msra.mxu0 %v239
  %322 = vmatprep.subr.mxu0 0.0
  %323 = vmatpush1.msra.mxu0 %v240
  %324 = vmatprep.subr.mxu0 0.0
  %325 = vmatpush1.msra.mxu0 %v241
  %326 = vmatprep.subr.mxu0 0.0
  %327 = vmatpush1.msra.mxu0 %v242
  %328 = vmatprep.subr.mxu0 0.0
  %329 = vmatpush1.msra.mxu0 %v243
  %330 = vmatprep.subr.mxu0 0.0
  %331 = vmatpush1.msra.mxu0 %v244
  %332 = vmatprep.subr.mxu0 0.0
  %333 = vmatpush1.msra.mxu0 %v245
  %334 = vmatprep.subr.mxu0 0.0
  %335 = vmatpush1.msra.mxu0 %v246
  %336 = vmatprep.subr.mxu0 0.0
  %337 = vmatpush1.msra.mxu0 %v247
  %338 = vmatprep.subr.mxu0 0.0
  %339 = vmatpush1.msra.mxu0 %v248
  %340 = vmatprep.subr.mxu0 0.0
  %341 = vmatpush1.msra.mxu0 %v249
  %342 = vmatprep.subr.mxu0 0.0
  %343 = vmatpush1.msra.mxu0 %v250
  %344 = vmatprep.subr.mxu0 0.0
  %345 = vmatpush1.msra.mxu0 %v251
  %346 = vmatprep.subr.mxu0 0.0
  %347 = vmatpush1.msra.mxu0 %v252
  %348 = vmatprep.subr.mxu0 0.0
  %349 = vmatpush1.msra.mxu0 %v253
  %350 = vmatprep.mubr.f32.mxu0 %v219
  %351 = vmatmul.mubr.f32.gmra.mrb[0].mxu0 %v218
  %v352 = vpop.f32.mrb[0].mxu0
  %v353 = vadd.f32 0.0, %v352
  %v354 = vpop.f32.mrb[0].mxu0
  %355 = vdwg.mxu0
  %356 = vmatprep.subr.mxu0 0.0
  %357 = vmatpush1.msra.mxu0 %v254
  %358 = vmatprep.subr.mxu0 0.0
  %359 = vmatpush1.msra.mxu0 %v255
  %360 = vmatprep.subr.mxu0 0.0
  %361 = vmatpush1.msra.mxu0 %v256
  %362 = vmatprep.subr.mxu0 0.0
  %363 = vmatpush1.msra.mxu0 %v257
  %364 = vmatprep.subr.mxu0 0.0
  %365 = vmatpush1.msra.mxu0 %v258
  %366 = vmatprep.subr.mxu0 0.0
  %367 = vmatpush1.msra.mxu0 %v259
  %368 = vmatprep.subr.mxu0 0.0
  %369 = vmatpush1.msra.mxu0 %v260
  %370 = vmatprep.subr.mxu0 0.0
  %371 = vmatpush1.msra.mxu0 %v261
  %372 = vmatprep.subr.mxu0 0.0
  %373 = vmatpush1.msra.mxu0 %v262
  %374 = vmatprep.subr.mxu0 0.0
  %375 = vmatpush1.msra.mxu0 %v263
  %376 = vmatprep.subr.mxu0 0.0
  %377 = vmatpush1.msra.mxu0 %v264
  %378 = vmatprep.subr.mxu0 0.0
  %379 = vmatpush1.msra.mxu0 %v265
  %380 = vmatprep.subr.mxu0 0.0
  %381 = vmatpush1.msra.mxu0 %v266
  %382 = vmatprep.subr.mxu0 0.0
  %383 = vmatpush1.msra.mxu0 %v267
  %384 = vmatprep.subr.mxu0 0.0
  %385 = vmatpush1.msra.mxu0 %v268
  %386 = vmatprep.subr.mxu0 0.0
  %387 = vmatpush1.msra.mxu0 %v269
  %388 = vmatprep.subr.mxu0 0.0
  %389 = vmatpush1.msra.mxu0 %v270
  %390 = vmatprep.subr.mxu0 0.0
  %391 = vmatpush1.msra.mxu0 %v271
  %392 = vmatprep.subr.mxu0 0.0
  %393 = vmatpush1.msra.mxu0 %v272
  %394 = vmatprep.subr.mxu0 0.0
  %395 = vmatpush1.msra.mxu0 %v273
  %396 = vmatprep.subr.mxu0 0.0
  %397 = vmatpush1.msra.mxu0 %v274
  %398 = vmatprep.subr.mxu0 0.0
  %399 = vmatpush1.msra.mxu0 %v275
  %400 = vmatprep.subr.mxu0 0.0
  %401 = vmatpush1.msra.mxu0 %v276
  %402 = vmatprep.subr.mxu0 0.0
  %403 = vmatpush1.msra.mxu0 %v277
  %404 = vmatprep.subr.mxu0 0.0
  %405 = vmatpush1.msra.mxu0 %v278
  %406 = vmatprep.subr.mxu0 0.0
  %407 = vmatpush1.msra.mxu0 %v279
  %408 = vmatprep.subr.mxu0 0.0
  %409 = vmatpush1.msra.mxu0 %v280
  %410 = vmatprep.subr.mxu0 0.0
  %411 = vmatpush1.msra.mxu0 %v281
  %412 = vmatprep.subr.mxu0 0.0
  %413 = vmatpush1.msra.mxu0 %v282
  %414 = vmatprep.subr.mxu0 0.0
  %415 = vmatpush1.msra.mxu0 %v283
  %416 = vmatprep.subr.mxu0 0.0
  %417 = vmatpush1.msra.mxu0 %v284
  %418 = vmatprep.subr.mxu0 0.0
  %419 = vmatpush1.msra.mxu0 %v285
  %420 = vmatprep.mubr.f32.mxu0 %v221
  %421 = vmatmul.mubr.f32.gmra.mrb[0].mxu0 %v220
  %v422 = vpop.f32.mrb[0].mxu0
  %v423 = vadd.f32 %v353, %v422
  %v424 = vpop.f32.mrb[0].mxu0
  %425 = vdwg.mxu0
  %v426 = vld [vmem:[%s3] sm:$0xff]
  %v427 = vld [vmem:[%s3 + $0x8] sm:$0xff]
  %v428 = vld [vmem:[%s4] sm:$0xff]
  %v429 = vld [vmem:[%s4 + $0x8] sm:$0xff]
  %431 = vset.pattern.permute.xlu0 0
  %432 = vperm.xlu0 %431, %v428
  %v433 = vpop.permute.xlu0 %432
  %436 = vset.pattern.permute.xlu0 0
  %437 = vperm.xlu0 %436, %v429
  %v438 = vpop.permute.xlu0 %437
  %vm440 = vcmask 64512
  %v442 = vsel %vm440, %v426, 0
  %v445 = vsel %vm440, %v427, 0
  %447 = vmatprep.subr.mxu0 0.0
  %448 = vmatpush1.msra.mxu0 %v423
  %449 = vmatprep.subr.mxu0 0.0
  %450 = vmatpush1.msra.mxu0 0.0
  %451 = vmatprep.subr.mxu0 0.0
  %452 = vmatpush1.msra.mxu0 0.0
  %453 = vmatprep.subr.mxu0 0.0
  %454 = vmatpush1.msra.mxu0 0.0
  %455 = vmatprep.subr.mxu0 0.0
  %456 = vmatpush1.msra.mxu0 0.0
  %457 = vmatprep.subr.mxu0 0.0
  %458 = vmatpush1.msra.mxu0 0.0
  %459 = vmatprep.subr.mxu0 0.0
  %460 = vmatpush1.msra.mxu0 0.0
  %461 = vmatprep.subr.mxu0 0.0
  %462 = vmatpush1.msra.mxu0 0.0
  %463 = vmatprep.subr.mxu0 0.0
  %464 = vmatpush1.msra.mxu0 0.0
  %465 = vmatprep.subr.mxu0 0.0
  %466 = vmatpush1.msra.mxu0 0.0
  %467 = vmatprep.subr.mxu0 0.0
  %468 = vmatpush1.msra.mxu0 0.0
  %469 = vmatprep.subr.mxu0 0.0
  %470 = vmatpush1.msra.mxu0 0.0
  %471 = vmatprep.subr.mxu0 0.0
  %472 = vmatpush1.msra.mxu0 0.0
  %473 = vmatprep.subr.mxu0 0.0
  %474 = vmatpush1.msra.mxu0 0.0
  %475 = vmatprep.subr.mxu0 0.0
  %476 = vmatpush1.msra.mxu0 0.0
  %477 = vmatprep.subr.mxu0 0.0
  %478 = vmatpush1.msra.mxu0 0.0
  %479 = vmatprep.subr.mxu0 0.0
  %480 = vmatpush1.msra.mxu0 0.0
  %481 = vmatprep.subr.mxu0 0.0
  %482 = vmatpush1.msra.mxu0 0.0
  %483 = vmatprep.subr.mxu0 0.0
  %484 = vmatpush1.msra.mxu0 0.0
  %485 = vmatprep.subr.mxu0 0.0
  %486 = vmatpush1.msra.mxu0 0.0
  %487 = vmatprep.subr.mxu0 0.0
  %488 = vmatpush1.msra.mxu0 0.0
  %489 = vmatprep.subr.mxu0 0.0
  %490 = vmatpush1.msra.mxu0 0.0
  %491 = vmatprep.subr.mxu0 0.0
  %492 = vmatpush1.msra.mxu0 0.0
  %493 = vmatprep.subr.mxu0 0.0
  %494 = vmatpush1.msra.mxu0 0.0
  %495 = vmatprep.subr.mxu0 0.0
  %496 = vmatpush1.msra.mxu0 0.0
  %497 = vmatprep.subr.mxu0 0.0
  %498 = vmatpush1.msra.mxu0 0.0
  %499 = vmatprep.subr.mxu0 0.0
  %500 = vmatpush1.msra.mxu0 0.0
  %501 = vmatprep.subr.mxu0 0.0
  %502 = vmatpush1.msra.mxu0 0.0
  %503 = vmatprep.subr.mxu0 0.0
  %504 = vmatpush1.msra.mxu0 0.0
  %505 = vmatprep.subr.mxu0 0.0
  %506 = vmatpush1.msra.mxu0 0.0
  %507 = vmatprep.subr.mxu0 0.0
  %508 = vmatpush1.msra.mxu0 0.0
  %509 = vmatprep.subr.mxu0 0.0
  %510 = vmatpush1.msra.mxu0 0.0
  %511 = vmatprep.mubr.f32.mxu0 0.0
  %512 = vmatmul.mubr.f32.gmra.mrb[0].mxu0 %v442
  %v513 = vpop.f32.mrb[0].mxu0
  %v514 = vadd.f32 %v433, %v513
  %v515 = vpop.f32.mrb[0].mxu0
  %516 = vmatprep.mubr.f32.mxu0 0.0
  %517 = vmatmul.mubr.f32.gmra.mrb[0].mxu0 %v445
  %v518 = vpop.f32.mrb[0].mxu0
  %v519 = vadd.f32 %v438, %v518
  %v520 = vpop.f32.mrb[0].mxu0
  %521 = vdwg.mxu0
  %v522 = vmax.f32 %v514, 0.0
  %v523 = vmax.f32 %v519, 0.0
  %v524 = vld [vmem:[%s6] sm:$0xff]
  %v525 = vld [vmem:[%s6 + $0x8] sm:$0xff]
  %v526 = vld [vmem:[%s6 + $0x10] sm:$0xff]
  %v527 = vld [vmem:[%s6 + $0x18] sm:$0xff]
  %v528 = vld [vmem:[%s6 + $0x20] sm:$0xff]
  %v529 = vld [vmem:[%s6 + $0x28] sm:$0xff]
  %v530 = vld [vmem:[%s6 + $0x30] sm:$0xff]
  %v531 = vld [vmem:[%s6 + $0x38] sm:$0xff]
  %v532 = vld [vmem:[%s6 + $0x40] sm:$0xff]
  %v533 = vld [vmem:[%s6 + $0x48] sm:$0xff]
  %v534 = vld [vmem:[%s6 + $0x50] sm:$0xff]
  %v535 = vld [vmem:[%s6 + $0x58] sm:$0xff]
  %v536 = vld [vmem:[%s6 + $0x60] sm:$0xff]
  %v537 = vld [vmem:[%s6 + $0x68] sm:$0xff]
  %v538 = vld [vmem:[%s6 + $0x70] sm:$0xff]
  %v539 = vld [vmem:[%s6 + $0x78] sm:$0xff]
  %540 = vmatprep.subr.mxu0 0.0
  %541 = vmatpush1.msra.mxu0 %v524
  %542 = vmatprep.subr.mxu0 0.0
  %543 = vmatpush1.msra.mxu0 %v525
  %544 = vmatprep.subr.mxu0 0.0
  %545 = vmatpush1.msra.mxu0 %v526
  %546 = vmatprep.subr.mxu0 0.0
  %547 = vmatpush1.msra.mxu0 %v527
  %548 = vmatprep.subr.mxu0 0.0
  %549 = vmatpush1.msra.mxu0 %v528
  %550 = vmatprep.subr.mxu0 0.0
  %551 = vmatpush1.msra.mxu0 %v529
  %552 = vmatprep.subr.mxu0 0.0
  %553 = vmatpush1.msra.mxu0 %v530
  %554 = vmatprep.subr.mxu0 0.0
  %555 = vmatpush1.msra.mxu0 %v531
  %556 = vmatprep.subr.mxu0 0.0
  %557 = vmatpush1.msra.mxu0 %v532
  %558 = vmatprep.subr.mxu0 0.0
  %559 = vmatpush1.msra.mxu0 %v533
  %560 = vmatprep.subr.mxu0 0.0
  %561 = vmatpush1.msra.mxu0 %v534
  %562 = vmatprep.subr.mxu0 0.0
  %563 = vmatpush1.msra.mxu0 %v535
  %564 = vmatprep.subr.mxu0 0.0
  %565 = vmatpush1.msra.mxu0 %v536
  %566 = vmatprep.subr.mxu0 0.0
  %567 = vmatpush1.msra.mxu0 %v537
  %568 = vmatprep.subr.mxu0 0.0
  %569 = vmatpush1.msra.mxu0 %v538
  %570 = vmatprep.subr.mxu0 0.0
  %571 = vmatpush1.msra.mxu0 %v539
  %572 = vmatprep.subr.mxu0 0.0
  %573 = vmatpush1.msra.mxu0 0.0
  %574 = vmatprep.subr.mxu0 0.0
  %575 = vmatpush1.msra.mxu0 0.0
  %576 = vmatprep.subr.mxu0 0.0
  %577 = vmatpush1.msra.mxu0 0.0
  %578 = vmatprep.subr.mxu0 0.0
  %579 = vmatpush1.msra.mxu0 0.0
  %580 = vmatprep.subr.mxu0 0.0
  %581 = vmatpush1.msra.mxu0 0.0
  %582 = vmatprep.subr.mxu0 0.0
  %583 = vmatpush1.msra.mxu0 0.0
  %584 = vmatprep.subr.mxu0 0.0
  %585 = vmatpush1.msra.mxu0 0.0
  %586 = vmatprep.subr.mxu0 0.0
  %587 = vmatpush1.msra.mxu0 0.0
  %588 = vmatprep.subr.mxu0 0.0
  %589 = vmatpush1.msra.mxu0 0.0
  %590 = vmatprep.subr.mxu0 0.0
  %591 = vmatpush1.msra.mxu0 0.0
  %592 = vmatprep.subr.mxu0 0.0
  %593 = vmatpush1.msra.mxu0 0.0
  %594 = vmatprep.subr.mxu0 0.0
  %595 = vmatpush1.msra.mxu0 0.0
  %596 = vmatprep.subr.mxu0 0.0
  %597 = vmatpush1.msra.mxu0 0.0
  %598 = vmatprep.subr.mxu0 0.0
  %599 = vmatpush1.msra.mxu0 0.0
  %600 = vmatprep.subr.mxu0 0.0
  %601 = vmatpush1.msra.mxu0 0.0
  %602 = vmatprep.subr.mxu0 0.0
  %603 = vmatpush1.msra.mxu0 0.0
  %604 = vmatprep.mubr.f32.mxu0 0.0
  %605 = vmatmul.mubr.f32.gmra.mrb[0].mxu0 %v423
  %v606 = vpop.f32.mrb[0].mxu0
  %v607 = vadd.f32 0.0, %v606
  %v608 = vpop.f32.mrb[0].mxu0
  %609 = vdwg.mxu0
  %610 = vmatprep.subr.mxu0 0.0
  %611 = vmatpush1.msra.mxu0 %v524
  %612 = vmatprep.subr.mxu0 0.0
  %613 = vmatpush1.msra.mxu0 %v525
  %614 = vmatprep.subr.mxu0 0.0
  %615 = vmatpush1.msra.mxu0 %v526
  %616 = vmatprep.subr.mxu0 0.0
  %617 = vmatpush1.msra.mxu0 %v527
  %618 = vmatprep.subr.mxu0 0.0
  %619 = vmatpush1.msra.mxu0 %v528
  %620 = vmatprep.subr.mxu0 0.0
  %621 = vmatpush1.msra.mxu0 %v529
  %622 = vmatprep.subr.mxu0 0.0
  %623 = vmatpush1.msra.mxu0 %v530
  %624 = vmatprep.subr.mxu0 0.0
  %625 = vmatpush1.msra.mxu0 %v531
  %626 = vmatprep.subr.mxu0 0.0
  %627 = vmatpush1.msra.mxu0 %v532
  %628 = vmatprep.subr.mxu0 0.0
  %629 = vmatpush1.msra.mxu0 %v533
  %630 = vmatprep.subr.mxu0 0.0
  %631 = vmatpush1.msra.mxu0 %v534
  %632 = vmatprep.subr.mxu0 0.0
  %633 = vmatpush1.msra.mxu0 %v535
  %634 = vmatprep.subr.mxu0 0.0
  %635 = vmatpush1.msra.mxu0 %v536
  %636 = vmatprep.subr.mxu0 0.0
  %637 = vmatpush1.msra.mxu0 %v537
  %638 = vmatprep.subr.mxu0 0.0
  %639 = vmatpush1.msra.mxu0 %v538
  %640 = vmatprep.subr.mxu0 0.0
  %641 = vmatpush1.msra.mxu0 %v539
  %642 = vmatprep.subr.mxu0 0.0
  %643 = vmatpush1.msra.mxu0 0.0
  %644 = vmatprep.subr.mxu0 0.0
  %645 = vmatpush1.msra.mxu0 0.0
  %646 = vmatprep.subr.mxu0 0.0
  %647 = vmatpush1.msra.mxu0 0.0
  %648 = vmatprep.subr.mxu0 0.0
  %649 = vmatpush1.msra.mxu0 0.0
  %650 = vmatprep.subr.mxu0 0.0
  %651 = vmatpush1.msra.mxu0 0.0
  %652 = vmatprep.subr.mxu0 0.0
  %653 = vmatpush1.msra.mxu0 0.0
  %654 = vmatprep.subr.mxu0 0.0
  %655 = vmatpush1.msra.mxu0 0.0
  %656 = vmatprep.subr.mxu0 0.0
  %657 = vmatpush1.msra.mxu0 0.0
  %658 = vmatprep.subr.mxu0 0.0
  %659 = vmatpush1.msra.mxu0 0.0
  %660 = vmatprep.subr.mxu0 0.0
  %661 = vmatpush1.msra.mxu0 0.0
  %662 = vmatprep.subr.mxu0 0.0
  %663 = vmatpush1.msra.mxu0 0.0
  %664 = vmatprep.subr.mxu0 0.0
  %665 = vmatpush1.msra.mxu0 0.0
  %666 = vmatprep.subr.mxu0 0.0
  %667 = vmatpush1.msra.mxu0 0.0
  %668 = vmatprep.subr.mxu0 0.0
  %669 = vmatpush1.msra.mxu0 0.0
  %670 = vmatprep.subr.mxu0 0.0
  %671 = vmatpush1.msra.mxu0 0.0
  %672 = vmatprep.subr.mxu0 0.0
  %673 = vmatpush1.msra.mxu0 0.0
  %674 = vmatprep.mubr.f32.mxu0 0.0
  %675 = vmatmul.mubr.f32.gmra.mrb[0].mxu0 %v522
  %v676 = vpop.f32.mrb[0].mxu0
  %v677 = vadd.f32 0.0, %v676
  %v678 = vpop.f32.mrb[0].mxu0
  %679 = vmatprep.mubr.f32.mxu0 0.0
  %680 = vmatmul.mubr.f32.gmra.mrb[0].mxu0 %v523
  %v681 = vpop.f32.mrb[0].mxu0
  %v682 = vadd.f32 0.0, %v681
  %v683 = vpop.f32.mrb[0].mxu0
  %684 = vdwg.mxu0
  %v685 = vld [vmem:[%s7] sm:$0xff]
  %v686 = vld [vmem:[%s7 + $0x8] sm:$0xff]
  %v687 = vld [vmem:[%s7 + $0x10] sm:$0xff]
  %v688 = vld [vmem:[%s7 + $0x18] sm:$0xff]
  %v689 = vld [vmem:[%s7 + $0x20] sm:$0xff]
  %v690 = vld [vmem:[%s7 + $0x28] sm:$0xff]
  %v691 = vld [vmem:[%s7 + $0x30] sm:$0xff]
  %v692 = vld [vmem:[%s7 + $0x38] sm:$0xff]
  %v693 = vld [vmem:[%s7 + $0x40] sm:$0xff]
  %v694 = vld [vmem:[%s7 + $0x48] sm:$0xff]
  %v695 = vld [vmem:[%s7 + $0x50] sm:$0xff]
  %v696 = vld [vmem:[%s7 + $0x58] sm:$0xff]
  %v697 = vld [vmem:[%s7 + $0x60] sm:$0xff]
  %v698 = vld [vmem:[%s7 + $0x68] sm:$0xff]
  %v699 = vld [vmem:[%s7 + $0x70] sm:$0xff]
  %v700 = vld [vmem:[%s7 + $0x78] sm:$0xff]
  %v701 = vld [vmem:[%s8] sm:$0xff]
  %v702 = vld [vmem:[%s8 + $0x8] sm:$0xff]
  %v703 = vld [vmem:[%s8 + $0x10] sm:$0xff]
  %v704 = vld [vmem:[%s8 + $0x18] sm:$0xff]
  %v705 = vld [vmem:[%s8 + $0x20] sm:$0xff]
  %v706 = vld [vmem:[%s8 + $0x28] sm:$0xff]
  %v707 = vld [vmem:[%s8 + $0x30] sm:$0xff]
  %v708 = vld [vmem:[%s8 + $0x38] sm:$0xff]
  %v709 = vld [vmem:[%s8 + $0x40] sm:$0xff]
  %v710 = vld [vmem:[%s8 + $0x48] sm:$0xff]
  %v711 = vld [vmem:[%s8 + $0x50] sm:$0xff]
  %v712 = vld [vmem:[%s8 + $0x58] sm:$0xff]
  %v713 = vld [vmem:[%s8 + $0x60] sm:$0xff]
  %v714 = vld [vmem:[%s8 + $0x68] sm:$0xff]
  %v715 = vld [vmem:[%s8 + $0x70] sm:$0xff]
  %v716 = vld [vmem:[%s8 + $0x78] sm:$0xff]
  %718 = vset.pattern.permute.xlu0 0
  %719 = vperm.xlu0 %718, %v701
  %v720 = vpop.permute.xlu0 %719
  %723 = vset.pattern.permute.xlu0 0
  %724 = vperm.xlu0 %723, %v702
  %v725 = vpop.permute.xlu0 %724
  %728 = vset.pattern.permute.xlu0 0
  %729 = vperm.xlu0 %728, %v703
  %v730 = vpop.permute.xlu0 %729
  %733 = vset.pattern.permute.xlu0 0
  %734 = vperm.xlu0 %733, %v704
  %v735 = vpop.permute.xlu0 %734
  %738 = vset.pattern.permute.xlu0 0
  %739 = vperm.xlu0 %738, %v705
  %v740 = vpop.permute.xlu0 %739
  %743 = vset.pattern.permute.xlu0 0
  %744 = vperm.xlu0 %743, %v706
  %v745 = vpop.permute.xlu0 %744
  %748 = vset.pattern.permute.xlu0 0
  %749 = vperm.xlu0 %748, %v707
  %v750 = vpop.permute.xlu0 %749
  %753 = vset.pattern.permute.xlu0 0
  %754 = vperm.xlu0 %753, %v708
  %v755 = vpop.permute.xlu0 %754
  %758 = vset.pattern.permute.xlu0 0
  %759 = vperm.xlu0 %758, %v709
  %v760 = vpop.permute.xlu0 %759
  %763 = vset.pattern.permute.xlu0 0
  %764 = vperm.xlu0 %763, %v710
  %v765 = vpop.permute.xlu0 %764
  %768 = vset.pattern.permute.xlu0 0
  %769 = vperm.xlu0 %768, %v711
  %v770 = vpop.permute.xlu0 %769
  %773 = vset.pattern.permute.xlu0 0
  %774 = vperm.xlu0 %773, %v712
  %v775 = vpop.permute.xlu0 %774
  %778 = vset.pattern.permute.xlu0 0
  %779 = vperm.xlu0 %778, %v713
  %v780 = vpop.permute.xlu0 %779
  %783 = vset.pattern.permute.xlu0 0
  %784 = vperm.xlu0 %783, %v714
  %v785 = vpop.permute.xlu0 %784
  %788 = vset.pattern.permute.xlu0 0
  %789 = vperm.xlu0 %788, %v715
  %v790 = vpop.permute.xlu0 %789
  %793 = vset.pattern.permute.xlu0 0
  %794 = vperm.xlu0 %793, %v716
  %v795 = vpop.permute.xlu0 %794
  %v798 = vsel %vm440, %v685, 0
  %v801 = vsel %vm440, %v686, 0
  %v804 = vsel %vm440, %v687, 0
  %v807 = vsel %vm440, %v688, 0
  %v810 = vsel %vm440, %v689, 0
  %v813 = vsel %vm440, %v690, 0
  %v816 = vsel %vm440, %v691, 0
  %v819 = vsel %vm440, %v692, 0
  %v822 = vsel %vm440, %v693, 0
  %v825 = vsel %vm440, %v694, 0
  %v828 = vsel %vm440, %v695, 0
  %v831 = vsel %vm440, %v696, 0
  %v834 = vsel %vm440, %v697, 0
  %v837 = vsel %vm440, %v698, 0
  %v840 = vsel %vm440, %v699, 0
  %v843 = vsel %vm440, %v700, 0
  %845 = vmatprep.subr.mxu0 0.0
  %846 = vmatpush1.msra.mxu0 %v607
  %847 = vmatprep.subr.mxu0 0.0
  %848 = vmatpush1.msra.mxu0 0.0
  %849 = vmatprep.subr.mxu0 0.0
  %850 = vmatpush1.msra.mxu0 0.0
  %851 = vmatprep.subr.mxu0 0.0
  %852 = vmatpush1.msra.mxu0 0.0
  %853 = vmatprep.subr.mxu0 0.0
  %854 = vmatpush1.msra.mxu0 0.0
  %855 = vmatprep.subr.mxu0 0.0
  %856 = vmatpush1.msra.mxu0 0.0
  %857 = vmatprep.subr.mxu0 0.0
  %858 = vmatpush1.msra.mxu0 0.0
  %859 = vmatprep.subr.mxu0 0.0
  %860 = vmatpush1.msra.mxu0 0.0
  %861 = vmatprep.subr.mxu0 0.0
  %862 = vmatpush1.msra.mxu0 0.0
  %863 = vmatprep.subr.mxu0 0.0
  %864 = vmatpush1.msra.mxu0 0.0
  %865 = vmatprep.subr.mxu0 0.0
  %866 = vmatpush1.msra.mxu0 0.0
  %867 = vmatprep.subr.mxu0 0.0
  %868 = vmatpush1.msra.mxu0 0.0
  %869 = vmatprep.subr.mxu0 0.0
  %870 = vmatpush1.msra.mxu0 0.0
  %871 = vmatprep.subr.mxu0 0.0
  %872 = vmatpush1.msra.mxu0 0.0
  %873 = vmatprep.subr.mxu0 0.0
  %874 = vmatpush1.msra.mxu0 0.0
  %875 = vmatprep.subr.mxu0 0.0
  %876 = vmatpush1.msra.mxu0 0.0
  %877 = vmatprep.subr.mxu0 0.0
  %878 = vmatpush1.msra.mxu0 0.0
  %879 = vmatprep.subr.mxu0 0.0
  %880 = vmatpush1.msra.mxu0 0.0
  %881 = vmatprep.subr.mxu0 0.0
  %882 = vmatpush1.msra.mxu0 0.0
  %883 = vmatprep.subr.mxu0 0.0
  %884 = vmatpush1.msra.mxu0 0.0
  %885 = vmatprep.subr.mxu0 0.0
  %886 = vmatpush1.msra.mxu0 0.0
  %887 = vmatprep.subr.mxu0 0.0
  %888 = vmatpush1.msra.mxu0 0.0
  %889 = vmatprep.subr.mxu0 0.0
  %890 = vmatpush1.msra.mxu0 0.0
  %891 = vmatprep.subr.mxu0 0.0
  %892 = vmatpush1.msra.mxu0 0.0
  %893 = vmatprep.subr.mxu0 0.0
  %894 = vmatpush1.msra.mxu0 0.0
  %895 = vmatprep.subr.mxu0 0.0
  %896 = vmatpush1.msra.mxu0 0.0
  %897 = vmatprep.subr.mxu0 0.0
  %898 = vmatpush1.msra.mxu0 0.0
  %899 = vmatprep.subr.mxu0 0.0
  %900 = vmatpush1.msra.mxu0 0.0
  %901 = vmatprep.subr.mxu0 0.0
  %902 = vmatpush1.msra.mxu0 0.0
  %903 = vmatprep.subr.mxu0 0.0
  %904 = vmatpush1.msra.mxu0 0.0
  %905 = vmatprep.subr.mxu0 0.0
  %906 = vmatpush1.msra.mxu0 0.0
  %907 = vmatprep.subr.mxu0 0.0
  %908 = vmatpush1.msra.mxu0 0.0
  %909 = vmatprep.mubr.f32.mxu0 0.0
  %910 = vmatmul.mubr.f32.gmra.mrb[0].mxu0 %v798
  %v911 = vpop.f32.mrb[0].mxu0
  %v912 = vadd.f32 %v720, %v911
  %v913 = vpop.f32.mrb[0].mxu0
  %914 = vmatprep.mubr.f32.mxu0 0.0
  %915 = vmatmul.mubr.f32.gmra.mrb[0].mxu0 %v801
  %v916 = vpop.f32.mrb[0].mxu0
  %v917 = vadd.f32 %v725, %v916
  %v918 = vpop.f32.mrb[0].mxu0
  %919 = vmatprep.mubr.f32.mxu0 0.0
  %920 = vmatmul.mubr.f32.gmra.mrb[0].mxu0 %v804
  %v921 = vpop.f32.mrb[0].mxu0
  %v922 = vadd.f32 %v730, %v921
  %v923 = vpop.f32.mrb[0].mxu0
  %924 = vmatprep.mubr.f32.mxu0 0.0
  %925 = vmatmul.mubr.f32.gmra.mrb[0].mxu0 %v807
  %v926 = vpop.f32.mrb[0].mxu0
  %v927 = vadd.f32 %v735, %v926
  %v928 = vpop.f32.mrb[0].mxu0
  %929 = vmatprep.mubr.f32.mxu0 0.0
  %930 = vmatmul.mubr.f32.gmra.mrb[0].mxu0 %v810
  %v931 = vpop.f32.mrb[0].mxu0
  %v932 = vadd.f32 %v740, %v931
  %v933 = vpop.f32.mrb[0].mxu0
  %934 = vmatprep.mubr.f32.mxu0 0.0
  %935 = vmatmul.mubr.f32.gmra.mrb[0].mxu0 %v813
  %v936 = vpop.f32.mrb[0].mxu0
  %v937 = vadd.f32 %v745, %v936
  %v938 = vpop.f32.mrb[0].mxu0
  %939 = vmatprep.mubr.f32.mxu0 0.0
  %940 = vmatmul.mubr.f32.gmra.mrb[0].mxu0 %v816
  %v941 = vpop.f32.mrb[0].mxu0
  %v942 = vadd.f32 %v750, %v941
  %v943 = vpop.f32.mrb[0].mxu0
  %944 = vmatprep.mubr.f32.mxu0 0.0
  %945 = vmatmul.mubr.f32.gmra.mrb[0].mxu0 %v819
  %v946 = vpop.f32.mrb[0].mxu0
  %v947 = vadd.f32 %v755, %v946
  %v948 = vpop.f32.mrb[0].mxu0
  %949 = vmatprep.mubr.f32.mxu0 0.0
  %950 = vmatmul.mubr.f32.gmra.mrb[0].mxu0 %v822
  %v951 = vpop.f32.mrb[0].mxu0
  %v952 = vadd.f32 %v760, %v951
  %v953 = vpop.f32.mrb[0].mxu0
  %954 = vmatprep.mubr.f32.mxu0 0.0
  %955 = vmatmul.mubr.f32.gmra.mrb[0].mxu0 %v825
  %v956 = vpop.f32.mrb[0].mxu0
  %v957 = vadd.f32 %v765, %v956
  %v958 = vpop.f32.mrb[0].mxu0
  %959 = vmatprep.mubr.f32.mxu0 0.0
  %960 = vmatmul.mubr.f32.gmra.mrb[0].mxu0 %v828
  %v961 = vpop.f32.mrb[0].mxu0
  %v962 = vadd.f32 %v770, %v961
  %v963 = vpop.f32.mrb[0].mxu0
  %964 = vmatprep.mubr.f32.mxu0 0.0
  %965 = vmatmul.mubr.f32.gmra.mrb[0].mxu0 %v831
  %v966 = vpop.f32.mrb[0].mxu0
  %v967 = vadd.f32 %v775, %v966
  %v968 = vpop.f32.mrb[0].mxu0
  %969 = vmatprep.mubr.f32.mxu0 0.0
  %970 = vmatmul.mubr.f32.gmra.mrb[0].mxu0 %v834
  %v971 = vpop.f32.mrb[0].mxu0
  %v972 = vadd.f32 %v780, %v971
  %v973 = vpop.f32.mrb[0].mxu0
  %974 = vmatprep.mubr.f32.mxu0 0.0
  %975 = vmatmul.mubr.f32.gmra.mrb[0].mxu0 %v837
  %v976 = vpop.f32.mrb[0].mxu0
  %v977 = vadd.f32 %v785, %v976
  %v978 = vpop.f32.mrb[0].mxu0
  %979 = vmatprep.mubr.f32.mxu0 0.0
  %980 = vmatmul.mubr.f32.gmra.mrb[0].mxu0 %v840
  %v981 = vpop.f32.mrb[0].mxu0
  %v982 = vadd.f32 %v790, %v981
  %v983 = vpop.f32.mrb[0].mxu0
  %984 = vmatprep.mubr.f32.mxu0 0.0
  %985 = vmatmul.mubr.f32.gmra.mrb[0].mxu0 %v843
  %v986 = vpop.f32.mrb[0].mxu0
  %v987 = vadd.f32 %v795, %v986
  %v988 = vpop.f32.mrb[0].mxu0
  %989 = vdwg.mxu0
  %v990 = vmax.f32 %v912, 0.0
  %v991 = vmax.f32 %v917, 0.0
  %v992 = vmax.f32 %v922, 0.0
  %v993 = vmax.f32 %v927, 0.0
  %v994 = vmax.f32 %v932, 0.0
  %v995 = vmax.f32 %v937, 0.0
  %v996 = vmax.f32 %v942, 0.0
  %v997 = vmax.f32 %v947, 0.0
  %v998 = vmax.f32 %v952, 0.0
  %v999 = vmax.f32 %v957, 0.0
  %v1000 = vmax.f32 %v962, 0.0
  %v1001 = vmax.f32 %v967, 0.0
  %v1002 = vmax.f32 %v972, 0.0
  %v1003 = vmax.f32 %v977, 0.0
  %v1004 = vmax.f32 %v982, 0.0
  %v1005 = vmax.f32 %v987, 0.0
  %v1006 = vld [vmem:[%s9] sm:$0xff]
  %v1007 = vld [vmem:[%s9 + $0x8] sm:$0xff]
  %v1008 = vld [vmem:[%s9 + $0x10] sm:$0xff]
  %v1009 = vld [vmem:[%s9 + $0x18] sm:$0xff]
  %v1010 = vld [vmem:[%s9 + $0x20] sm:$0xff]
  %v1011 = vld [vmem:[%s9 + $0x28] sm:$0xff]
  %v1012 = vld [vmem:[%s9 + $0x30] sm:$0xff]
  %v1013 = vld [vmem:[%s9 + $0x38] sm:$0xff]
  %v1014 = vld [vmem:[%s9 + $0x40] sm:$0xff]
  %v1015 = vld [vmem:[%s9 + $0x48] sm:$0xff]
  %v1016 = vld [vmem:[%s9 + $0x50] sm:$0xff]
  %v1017 = vld [vmem:[%s9 + $0x58] sm:$0xff]
  %v1018 = vld [vmem:[%s9 + $0x60] sm:$0xff]
  %v1019 = vld [vmem:[%s9 + $0x68] sm:$0xff]
  %v1020 = vld [vmem:[%s9 + $0x70] sm:$0xff]
  %v1021 = vld [vmem:[%s9 + $0x78] sm:$0xff]
  %v1022 = vld [vmem:[%s10] sm:$0xff]
  %v1023 = vld [vmem:[%s10 + $0x8] sm:$0xff]
  %v1024 = vld [vmem:[%s10 + $0x10] sm:$0xff]
  %v1025 = vld [vmem:[%s10 + $0x18] sm:$0xff]
  %v1026 = vld [vmem:[%s10 + $0x20] sm:$0xff]
  %v1027 = vld [vmem:[%s10 + $0x28] sm:$0xff]
  %v1028 = vld [vmem:[%s10 + $0x30] sm:$0xff]
  %v1029 = vld [vmem:[%s10 + $0x38] sm:$0xff]
  %v1030 = vld [vmem:[%s10 + $0x40] sm:$0xff]
  %v1031 = vld [vmem:[%s10 + $0x48] sm:$0xff]
  %v1032 = vld [vmem:[%s10 + $0x50] sm:$0xff]
  %v1033 = vld [vmem:[%s10 + $0x58] sm:$0xff]
  %v1034 = vld [vmem:[%s10 + $0x60] sm:$0xff]
  %v1035 = vld [vmem:[%s10 + $0x68] sm:$0xff]
  %v1036 = vld [vmem:[%s10 + $0x70] sm:$0xff]
  %v1037 = vld [vmem:[%s10 + $0x78] sm:$0xff]
  %1039 = vset.pattern.permute.xlu0 0
  %1040 = vperm.xlu0 %1039, %v1022
  %v1041 = vpop.permute.xlu0 %1040
  %1044 = vset.pattern.permute.xlu0 0
  %1045 = vperm.xlu0 %1044, %v1023
  %v1046 = vpop.permute.xlu0 %1045
  %1049 = vset.pattern.permute.xlu0 0
  %1050 = vperm.xlu0 %1049, %v1024
  %v1051 = vpop.permute.xlu0 %1050
  %1054 = vset.pattern.permute.xlu0 0
  %1055 = vperm.xlu0 %1054, %v1025
  %v1056 = vpop.permute.xlu0 %1055
  %1059 = vset.pattern.permute.xlu0 0
  %1060 = vperm.xlu0 %1059, %v1026
  %v1061 = vpop.permute.xlu0 %1060
  %1064 = vset.pattern.permute.xlu0 0
  %1065 = vperm.xlu0 %1064, %v1027
  %v1066 = vpop.permute.xlu0 %1065
  %1069 = vset.pattern.permute.xlu0 0
  %1070 = vperm.xlu0 %1069, %v1028
  %v1071 = vpop.permute.xlu0 %1070
  %1074 = vset.pattern.permute.xlu0 0
  %1075 = vperm.xlu0 %1074, %v1029
  %v1076 = vpop.permute.xlu0 %1075
  %1079 = vset.pattern.permute.xlu0 0
  %1080 = vperm.xlu0 %1079, %v1030
  %v1081 = vpop.permute.xlu0 %1080
  %1084 = vset.pattern.permute.xlu0 0
  %1085 = vperm.xlu0 %1084, %v1031
  %v1086 = vpop.permute.xlu0 %1085
  %1089 = vset.pattern.permute.xlu0 0
  %1090 = vperm.xlu0 %1089, %v1032
  %v1091 = vpop.permute.xlu0 %1090
  %1094 = vset.pattern.permute.xlu0 0
  %1095 = vperm.xlu0 %1094, %v1033
  %v1096 = vpop.permute.xlu0 %1095
  %1099 = vset.pattern.permute.xlu0 0
  %1100 = vperm.xlu0 %1099, %v1034
  %v1101 = vpop.permute.xlu0 %1100
  %1104 = vset.pattern.permute.xlu0 0
  %1105 = vperm.xlu0 %1104, %v1035
  %v1106 = vpop.permute.xlu0 %1105
  %1109 = vset.pattern.permute.xlu0 0
  %1110 = vperm.xlu0 %1109, %v1036
  %v1111 = vpop.permute.xlu0 %1110
  %1114 = vset.pattern.permute.xlu0 0
  %1115 = vperm.xlu0 %1114, %v1037
  %v1116 = vpop.permute.xlu0 %1115
  %vm1118 = vcmask 130048
  %v1120 = vsel %vm1118, %v1006, 0
  %v1123 = vsel %vm1118, %v1007, 0
  %v1126 = vsel %vm1118, %v1008, 0
  %v1129 = vsel %vm1118, %v1009, 0
  %v1132 = vsel %vm1118, %v1010, 0
  %v1135 = vsel %vm1118, %v1011, 0
  %v1138 = vsel %vm1118, %v1012, 0
  %v1141 = vsel %vm1118, %v1013, 0
  %v1144 = vsel %vm1118, %v1014, 0
  %v1147 = vsel %vm1118, %v1015, 0
  %v1150 = vsel %vm1118, %v1016, 0
  %v1153 = vsel %vm1118, %v1017, 0
  %v1156 = vsel %vm1118, %v1018, 0
  %v1159 = vsel %vm1118, %v1019, 0
  %v1162 = vsel %vm1118, %v1020, 0
  %v1165 = vsel %vm1118, %v1021, 0
  %1167 = vmatprep.subr.mxu0 0.0
  %1168 = vmatpush1.msra.mxu0 %v677
  %1169 = vmatprep.subr.mxu0 0.0
  %1170 = vmatpush1.msra.mxu0 %v682
  %1171 = vmatprep.subr.mxu0 0.0
  %1172 = vmatpush1.msra.mxu0 0.0
  %1173 = vmatprep.subr.mxu0 0.0
  %1174 = vmatpush1.msra.mxu0 0.0
  %1175 = vmatprep.subr.mxu0 0.0
  %1176 = vmatpush1.msra.mxu0 0.0
  %1177 = vmatprep.subr.mxu0 0.0
  %1178 = vmatpush1.msra.mxu0 0.0
  %1179 = vmatprep.subr.mxu0 0.0
  %1180 = vmatpush1.msra.mxu0 0.0
  %1181 = vmatprep.subr.mxu0 0.0
  %1182 = vmatpush1.msra.mxu0 0.0
  %1183 = vmatprep.subr.mxu0 0.0
  %1184 = vmatpush1.msra.mxu0 0.0
  %1185 = vmatprep.subr.mxu0 0.0
  %1186 = vmatpush1.msra.mxu0 0.0
  %1187 = vmatprep.subr.mxu0 0.0
  %1188 = vmatpush1.msra.mxu0 0.0
  %1189 = vmatprep.subr.mxu0 0.0
  %1190 = vmatpush1.msra.mxu0 0.0
  %1191 = vmatprep.subr.mxu0 0.0
  %1192 = vmatpush1.msra.mxu0 0.0
  %1193 = vmatprep.subr.mxu0 0.0
  %1194 = vmatpush1.msra.mxu0 0.0
  %1195 = vmatprep.subr.mxu0 0.0
  %1196 = vmatpush1.msra.mxu0 0.0
  %1197 = vmatprep.subr.mxu0 0.0
  %1198 = vmatpush1.msra.mxu0 0.0
  %1199 = vmatprep.subr.mxu0 0.0
  %1200 = vmatpush1.msra.mxu0 0.0
  %1201 = vmatprep.subr.mxu0 0.0
  %1202 = vmatpush1.msra.mxu0 0.0
  %1203 = vmatprep.subr.mxu0 0.0
  %1204 = vmatpush1.msra.mxu0 0.0
  %1205 = vmatprep.subr.mxu0 0.0
  %1206 = vmatpush1.msra.mxu0 0.0
  %1207 = vmatprep.subr.mxu0 0.0
  %1208 = vmatpush1.msra.mxu0 0.0
  %1209 = vmatprep.subr.mxu0 0.0
  %1210 = vmatpush1.msra.mxu0 0.0
  %1211 = vmatprep.subr.mxu0 0.0
  %1212 = vmatpush1.msra.mxu0 0.0
  %1213 = vmatprep.subr.mxu0 0.0
  %1214 = vmatpush1.msra.mxu0 0.0
  %1215 = vmatprep.subr.mxu0 0.0
  %1216 = vmatpush1.msra.mxu0 0.0
  %1217 = vmatprep.subr.mxu0 0.0
  %1218 = vmatpush1.msra.mxu0 0.0
  %1219 = vmatprep.subr.mxu0 0.0
  %1220 = vmatpush1.msra.mxu0 0.0
  %1221 = vmatprep.subr.mxu0 0.0
  %1222 = vmatpush1.msra.mxu0 0.0
  %1223 = vmatprep.subr.mxu0 0.0
  %1224 = vmatpush1.msra.mxu0 0.0
  %1225 = vmatprep.subr.mxu0 0.0
  %1226 = vmatpush1.msra.mxu0 0.0
  %1227 = vmatprep.subr.mxu0 0.0
  %1228 = vmatpush1.msra.mxu0 0.0
  %1229 = vmatprep.subr.mxu0 0.0
  %1230 = vmatpush1.msra.mxu0 0.0
  %1231 = vmatprep.mubr.f32.mxu0 0.0
  %1232 = vmatmul.mubr.f32.gmra.mrb[0].mxu0 %v1120
  %v1233 = vpop.f32.mrb[0].mxu0
  %v1234 = vadd.f32 %v1041, %v1233
  %v1235 = vpop.f32.mrb[0].mxu0
  %1236 = vmatprep.mubr.f32.mxu0 0.0
  %1237 = vmatmul.mubr.f32.gmra.mrb[0].mxu0 %v1123
  %v1238 = vpop.f32.mrb[0].mxu0
  %v1239 = vadd.f32 %v1046, %v1238
  %v1240 = vpop.f32.mrb[0].mxu0
  %1241 = vmatprep.mubr.f32.mxu0 0.0
  %1242 = vmatmul.mubr.f32.gmra.mrb[0].mxu0 %v1126
  %v1243 = vpop.f32.mrb[0].mxu0
  %v1244 = vadd.f32 %v1051, %v1243
  %v1245 = vpop.f32.mrb[0].mxu0
  %1246 = vmatprep.mubr.f32.mxu0 0.0
  %1247 = vmatmul.mubr.f32.gmra.mrb[0].mxu0 %v1129
  %v1248 = vpop.f32.mrb[0].mxu0
  %v1249 = vadd.f32 %v1056, %v1248
  %v1250 = vpop.f32.mrb[0].mxu0
  %1251 = vmatprep.mubr.f32.mxu0 0.0
  %1252 = vmatmul.mubr.f32.gmra.mrb[0].mxu0 %v1132
  %v1253 = vpop.f32.mrb[0].mxu0
  %v1254 = vadd.f32 %v1061, %v1253
  %v1255 = vpop.f32.mrb[0].mxu0
  %1256 = vmatprep.mubr.f32.mxu0 0.0
  %1257 = vmatmul.mubr.f32.gmra.mrb[0].mxu0 %v1135
  %v1258 = vpop.f32.mrb[0].mxu0
  %v1259 = vadd.f32 %v1066, %v1258
  %v1260 = vpop.f32.mrb[0].mxu0
  %1261 = vmatprep.mubr.f32.mxu0 0.0
  %1262 = vmatmul.mubr.f32.gmra.mrb[0].mxu0 %v1138
  %v1263 = vpop.f32.mrb[0].mxu0
  %v1264 = vadd.f32 %v1071, %v1263
  %v1265 = vpop.f32.mrb[0].mxu0
  %1266 = vmatprep.mubr.f32.mxu0 0.0
  %1267 = vmatmul.mubr.f32.gmra.mrb[0].mxu0 %v1141
  %v1268 = vpop.f32.mrb[0].mxu0
  %v1269 = vadd.f32 %v1076, %v1268
  %v1270 = vpop.f32.mrb[0].mxu0
  %1271 = vmatprep.mubr.f32.mxu0 0.0
  %1272 = vmatmul.mubr.f32.gmra.mrb[0].mxu0 %v1144
  %v1273 = vpop.f32.mrb[0].mxu0
  %v1274 = vadd.f32 %v1081, %v1273
  %v1275 = vpop.f32.mrb[0].mxu0
  %1276 = vmatprep.mubr.f32.mxu0 0.0
  %1277 = vmatmul.mubr.f32.gmra.mrb[0].mxu0 %v1147
  %v1278 = vpop.f32.mrb[0].mxu0
  %v1279 = vadd.f32 %v1086, %v1278
  %v1280 = vpop.f32.mrb[0].mxu0
  %1281 = vmatprep.mubr.f32.mxu0 0.0
  %1282 = vmatmul.mubr.f32.gmra.mrb[0].mxu0 %v1150
  %v1283 = vpop.f32.mrb[0].mxu0
  %v1284 = vadd.f32 %v1091, %v1283
  %v1285 = vpop.f32.mrb[0].mxu0
  %1286 = vmatprep.mubr.f32.mxu0 0.0
  %1287 = vmatmul.mubr.f32.gmra.mrb[0].mxu0 %v1153
  %v1288 = vpop.f32.mrb[0].mxu0
  %v1289 = vadd.f32 %v1096, %v1288
  %v1290 = vpop.f32.mrb[0].mxu0
  %1291 = vmatprep.mubr.f32.mxu0 0.0
  %1292 = vmatmul.mubr.f32.gmra.mrb[0].mxu0 %v1156
  %v1293 = vpop.f32.mrb[0].mxu0
  %v1294 = vadd.f32 %v1101, %v1293
  %v1295 = vpop.f32.mrb[0].mxu0
  %1296 = vmatprep.mubr.f32.mxu0 0.0
  %1297 = vmatmul.mubr.f32.gmra.mrb[0].mxu0 %v1159
  %v1298 = vpop.f32.mrb[0].mxu0
  %v1299 = vadd.f32 %v1106, %v1298
  %v1300 = vpop.f32.mrb[0].mxu0
  %1301 = vmatprep.mubr.f32.mxu0 0.0
  %1302 = vmatmul.mubr.f32.gmra.mrb[0].mxu0 %v1162
  %v1303 = vpop.f32.mrb[0].mxu0
  %v1304 = vadd.f32 %v1111, %v1303
  %v1305 = vpop.f32.mrb[0].mxu0
  %1306 = vmatprep.mubr.f32.mxu0 0.0
  %1307 = vmatmul.mubr.f32.gmra.mrb[0].mxu0 %v1165
  %v1308 = vpop.f32.mrb[0].mxu0
  %v1309 = vadd.f32 %v1116, %v1308
  %v1310 = vpop.f32.mrb[0].mxu0
  %1311 = vdwg.mxu0
  %v1312 = vmax.f32 %v1234, 0.0
  %v1313 = vmax.f32 %v1239, 0.0
  %v1314 = vmax.f32 %v1244, 0.0
  %v1315 = vmax.f32 %v1249, 0.0
  %v1316 = vmax.f32 %v1254, 0.0
  %v1317 = vmax.f32 %v1259, 0.0
  %v1318 = vmax.f32 %v1264, 0.0
  %v1319 = vmax.f32 %v1269, 0.0
  %v1320 = vmax.f32 %v1274, 0.0
  %v1321 = vmax.f32 %v1279, 0.0
  %v1322 = vmax.f32 %v1284, 0.0
  %v1323 = vmax.f32 %v1289, 0.0
  %v1324 = vmax.f32 %v1294, 0.0
  %v1325 = vmax.f32 %v1299, 0.0
  %v1326 = vmax.f32 %v1304, 0.0
  %v1327 = vmax.f32 %v1309, 0.0
  %v1328 = vld [vmem:[%s11] sm:$0xff]
  %v1329 = vld [vmem:[%s11 + $0x8] sm:$0xff]
  %v1330 = vld [vmem:[%s12] sm:$0xff]
  %v1331 = vld [vmem:[%s12 + $0x8] sm:$0xff]
  %1332 = vmatprep.subr.mxu0 0.0
  %1333 = vmatpush1.msra.mxu0 %v990
  %1334 = vmatprep.subr.mxu0 0.0
  %1335 = vmatpush1.msra.mxu0 %v991
  %1336 = vmatprep.subr.mxu0 0.0
  %1337 = vmatpush1.msra.mxu0 %v992
  %1338 = vmatprep.subr.mxu0 0.0
  %1339 = vmatpush1.msra.mxu0 %v993
  %1340 = vmatprep.subr.mxu0 0.0
  %1341 = vmatpush1.msra.mxu0 %v994
  %1342 = vmatprep.subr.mxu0 0.0
  %1343 = vmatpush1.msra.mxu0 %v995
  %1344 = vmatprep.subr.mxu0 0.0
  %1345 = vmatpush1.msra.mxu0 %v996
  %1346 = vmatprep.subr.mxu0 0.0
  %1347 = vmatpush1.msra.mxu0 %v997
  %1348 = vmatprep.subr.mxu0 0.0
  %1349 = vmatpush1.msra.mxu0 %v998
  %1350 = vmatprep.subr.mxu0 0.0
  %1351 = vmatpush1.msra.mxu0 %v999
  %1352 = vmatprep.subr.mxu0 0.0
  %1353 = vmatpush1.msra.mxu0 %v1000
  %1354 = vmatprep.subr.mxu0 0.0
  %1355 = vmatpush1.msra.mxu0 %v1001
  %1356 = vmatprep.subr.mxu0 0.0
  %1357 = vmatpush1.msra.mxu0 %v1002
  %1358 = vmatprep.subr.mxu0 0.0
  %1359 = vmatpush1.msra.mxu0 %v1003
  %1360 = vmatprep.subr.mxu0 0.0
  %1361 = vmatpush1.msra.mxu0 %v1004
  %1362 = vmatprep.subr.mxu0 0.0
  %1363 = vmatpush1.msra.mxu0 %v1005
  %1364 = vmatprep.subr.mxu0 0.0
  %1365 = vmatpush1.msra.mxu0 0.0
  %1366 = vmatprep.subr.mxu0 0.0
  %1367 = vmatpush1.msra.mxu0 0.0
  %1368 = vmatprep.subr.mxu0 0.0
  %1369 = vmatpush1.msra.mxu0 0.0
  %1370 = vmatprep.subr.mxu0 0.0
  %1371 = vmatpush1.msra.mxu0 0.0
  %1372 = vmatprep.subr.mxu0 0.0
  %1373 = vmatpush1.msra.mxu0 0.0
  %1374 = vmatprep.subr.mxu0 0.0
  %1375 = vmatpush1.msra.mxu0 0.0
  %1376 = vmatprep.subr.mxu0 0.0
  %1377 = vmatpush1.msra.mxu0 0.0
  %1378 = vmatprep.subr.mxu0 0.0
  %1379 = vmatpush1.msra.mxu0 0.0
  %1380 = vmatprep.subr.mxu0 0.0
  %1381 = vmatpush1.msra.mxu0 0.0
  %1382 = vmatprep.subr.mxu0 0.0
  %1383 = vmatpush1.msra.mxu0 0.0
  %1384 = vmatprep.subr.mxu0 0.0
  %1385 = vmatpush1.msra.mxu0 0.0
  %1386 = vmatprep.subr.mxu0 0.0
  %1387 = vmatpush1.msra.mxu0 0.0
  %1388 = vmatprep.subr.mxu0 0.0
  %1389 = vmatpush1.msra.mxu0 0.0
  %1390 = vmatprep.subr.mxu0 0.0
  %1391 = vmatpush1.msra.mxu0 0.0
  %1392 = vmatprep.subr.mxu0 0.0
  %1393 = vmatpush1.msra.mxu0 0.0
  %1394 = vmatprep.subr.mxu0 0.0
  %1395 = vmatpush1.msra.mxu0 0.0
  %1396 = vmatprep.mubr.f32.mxu0 0.0
  %1397 = vmatmul.mubr.f32.gmra.mrb[0].mxu0 %v1330
  %v1398 = vpop.f32.mrb[0].mxu0
  %v1399 = vadd.f32 0.0, %v1398
  %v1400 = vpop.f32.mrb[0].mxu0
  %1401 = vmatprep.mubr.f32.mxu0 0.0
  %1402 = vmatmul.mubr.f32.gmra.mrb[0].mxu0 %v1331
  %v1403 = vpop.f32.mrb[0].mxu0
  %v1404 = vadd.f32 0.0, %v1403
  %v1405 = vpop.f32.mrb[0].mxu0
  %1406 = vdwg.mxu0
  %v1408 = vsel %vm1118, %v1328, 0
  %v1411 = vsel %vm1118, %v1329, 0
  %1413 = vmatprep.subr.mxu0 0.0
  %1414 = vmatpush1.msra.mxu0 %v677
  %1415 = vmatprep.subr.mxu0 0.0
  %1416 = vmatpush1.msra.mxu0 %v682
  %1417 = vmatprep.subr.mxu0 0.0
  %1418 = vmatpush1.msra.mxu0 0.0
  %1419 = vmatprep.subr.mxu0 0.0
  %1420 = vmatpush1.msra.mxu0 0.0
  %1421 = vmatprep.subr.mxu0 0.0
  %1422 = vmatpush1.msra.mxu0 0.0
  %1423 = vmatprep.subr.mxu0 0.0
  %1424 = vmatpush1.msra.mxu0 0.0
  %1425 = vmatprep.subr.mxu0 0.0
  %1426 = vmatpush1.msra.mxu0 0.0
  %1427 = vmatprep.subr.mxu0 0.0
  %1428 = vmatpush1.msra.mxu0 0.0
  %1429 = vmatprep.subr.mxu0 0.0
  %1430 = vmatpush1.msra.mxu0 0.0
  %1431 = vmatprep.subr.mxu0 0.0
  %1432 = vmatpush1.msra.mxu0 0.0
  %1433 = vmatprep.subr.mxu0 0.0
  %1434 = vmatpush1.msra.mxu0 0.0
  %1435 = vmatprep.subr.mxu0 0.0
  %1436 = vmatpush1.msra.mxu0 0.0
  %1437 = vmatprep.subr.mxu0 0.0
  %1438 = vmatpush1.msra.mxu0 0.0
  %1439 = vmatprep.subr.mxu0 0.0
  %1440 = vmatpush1.msra.mxu0 0.0
  %1441 = vmatprep.subr.mxu0 0.0
  %1442 = vmatpush1.msra.mxu0 0.0
  %1443 = vmatprep.subr.mxu0 0.0
  %1444 = vmatpush1.msra.mxu0 0.0
  %1445 = vmatprep.subr.mxu0 0.0
  %1446 = vmatpush1.msra.mxu0 0.0
  %1447 = vmatprep.subr.mxu0 0.0
  %1448 = vmatpush1.msra.mxu0 0.0
  %1449 = vmatprep.subr.mxu0 0.0
  %1450 = vmatpush1.msra.mxu0 0.0
  %1451 = vmatprep.subr.mxu0 0.0
  %1452 = vmatpush1.msra.mxu0 0.0
  %1453 = vmatprep.subr.mxu0 0.0
  %1454 = vmatpush1.msra.mxu0 0.0
  %1455 = vmatprep.subr.mxu0 0.0
  %1456 = vmatpush1.msra.mxu0 0.0
  %1457 = vmatprep.subr.mxu0 0.0
  %1458 = vmatpush1.msra.mxu0 0.0
  %1459 = vmatprep.subr.mxu0 0.0
  %1460 = vmatpush1.msra.mxu0 0.0
  %1461 = vmatprep.subr.mxu0 0.0
  %1462 = vmatpush1.msra.mxu0 0.0
  %1463 = vmatprep.subr.mxu0 0.0
  %1464 = vmatpush1.msra.mxu0 0.0
  %1465 = vmatprep.subr.mxu0 0.0
  %1466 = vmatpush1.msra.mxu0 0.0
  %1467 = vmatprep.subr.mxu0 0.0
  %1468 = vmatpush1.msra.mxu0 0.0
  %1469 = vmatprep.subr.mxu0 0.0
  %1470 = vmatpush1.msra.mxu0 0.0
  %1471 = vmatprep.subr.mxu0 0.0
  %1472 = vmatpush1.msra.mxu0 0.0
  %1473 = vmatprep.subr.mxu0 0.0
  %1474 = vmatpush1.msra.mxu0 0.0
  %1475 = vmatprep.subr.mxu0 0.0
  %1476 = vmatpush1.msra.mxu0 0.0
  %1477 = vmatprep.mubr.f32.mxu0 0.0
  %1478 = vmatmul.mubr.f32.gmra.mrb[0].mxu0 %v1408
  %v1479 = vpop.f32.mrb[0].mxu0
  %v1480 = vadd.f32 %v1399, %v1479
  %v1481 = vpop.f32.mrb[0].mxu0
  %1482 = vmatprep.mubr.f32.mxu0 0.0
  %1483 = vmatmul.mubr.f32.gmra.mrb[0].mxu0 %v1411
  %v1484 = vpop.f32.mrb[0].mxu0
  %v1485 = vadd.f32 %v1404, %v1484
  %v1486 = vpop.f32.mrb[0].mxu0
  %1487 = vdwg.mxu0
  %v1488 = vld [vmem:[%s13] sm:$0xff]
  %v1489 = vld [vmem:[%s13 + $0x8] sm:$0xff]
  %1490 = vmatprep.subr.mxu0 0.0
  %1491 = vmatpush1.msra.mxu0 %v1312
  %1492 = vmatprep.subr.mxu0 0.0
  %1493 = vmatpush1.msra.mxu0 %v1313
  %1494 = vmatprep.subr.mxu0 0.0
  %1495 = vmatpush1.msra.mxu0 %v1314
  %1496 = vmatprep.subr.mxu0 0.0
  %1497 = vmatpush1.msra.mxu0 %v1315
  %1498 = vmatprep.subr.mxu0 0.0
  %1499 = vmatpush1.msra.mxu0 %v1316
  %1500 = vmatprep.subr.mxu0 0.0
  %1501 = vmatpush1.msra.mxu0 %v1317
  %1502 = vmatprep.subr.mxu0 0.0
  %1503 = vmatpush1.msra.mxu0 %v1318
  %1504 = vmatprep.subr.mxu0 0.0
  %1505 = vmatpush1.msra.mxu0 %v1319
  %1506 = vmatprep.subr.mxu0 0.0
  %1507 = vmatpush1.msra.mxu0 %v1320
  %1508 = vmatprep.subr.mxu0 0.0
  %1509 = vmatpush1.msra.mxu0 %v1321
  %1510 = vmatprep.subr.mxu0 0.0
  %1511 = vmatpush1.msra.mxu0 %v1322
  %1512 = vmatprep.subr.mxu0 0.0
  %1513 = vmatpush1.msra.mxu0 %v1323
  %1514 = vmatprep.subr.mxu0 0.0
  %1515 = vmatpush1.msra.mxu0 %v1324
  %1516 = vmatprep.subr.mxu0 0.0
  %1517 = vmatpush1.msra.mxu0 %v1325
  %1518 = vmatprep.subr.mxu0 0.0
  %1519 = vmatpush1.msra.mxu0 %v1326
  %1520 = vmatprep.subr.mxu0 0.0
  %1521 = vmatpush1.msra.mxu0 %v1327
  %1522 = vmatprep.subr.mxu0 0.0
  %1523 = vmatpush1.msra.mxu0 0.0
  %1524 = vmatprep.subr.mxu0 0.0
  %1525 = vmatpush1.msra.mxu0 0.0
  %1526 = vmatprep.subr.mxu0 0.0
  %1527 = vmatpush1.msra.mxu0 0.0
  %1528 = vmatprep.subr.mxu0 0.0
  %1529 = vmatpush1.msra.mxu0 0.0
  %1530 = vmatprep.subr.mxu0 0.0
  %1531 = vmatpush1.msra.mxu0 0.0
  %1532 = vmatprep.subr.mxu0 0.0
  %1533 = vmatpush1.msra.mxu0 0.0
  %1534 = vmatprep.subr.mxu0 0.0
  %1535 = vmatpush1.msra.mxu0 0.0
  %1536 = vmatprep.subr.mxu0 0.0
  %1537 = vmatpush1.msra.mxu0 0.0
  %1538 = vmatprep.subr.mxu0 0.0
  %1539 = vmatpush1.msra.mxu0 0.0
  %1540 = vmatprep.subr.mxu0 0.0
  %1541 = vmatpush1.msra.mxu0 0.0
  %1542 = vmatprep.subr.mxu0 0.0
  %1543 = vmatpush1.msra.mxu0 0.0
  %1544 = vmatprep.subr.mxu0 0.0
  %1545 = vmatpush1.msra.mxu0 0.0
  %1546 = vmatprep.subr.mxu0 0.0
  %1547 = vmatpush1.msra.mxu0 0.0
  %1548 = vmatprep.subr.mxu0 0.0
  %1549 = vmatpush1.msra.mxu0 0.0
  %1550 = vmatprep.subr.mxu0 0.0
  %1551 = vmatpush1.msra.mxu0 0.0
  %1552 = vmatprep.subr.mxu0 0.0
  %1553 = vmatpush1.msra.mxu0 0.0
  %1554 = vmatprep.mubr.f32.mxu0 0.0
  %1555 = vmatmul.mubr.f32.gmra.mrb[0].mxu0 %v1488
  %v1556 = vpop.f32.mrb[0].mxu0
  %v1557 = vadd.f32 0.0, %v1556
  %v1558 = vpop.f32.mrb[0].mxu0
  %1559 = vmatprep.mubr.f32.mxu0 0.0
  %1560 = vmatmul.mubr.f32.gmra.mrb[0].mxu0 %v1489
  %v1561 = vpop.f32.mrb[0].mxu0
  %v1562 = vadd.f32 0.0, %v1561
  %v1563 = vpop.f32.mrb[0].mxu0
  %1564 = vdwg.mxu0
  %v1565 = vadd.f32 %v1480, %v1557
  %v1566 = vadd.f32 %v1485, %v1562
  %v1567 = vld [vmem:[%s14] sm:$0xff]
  %v1568 = vld [vmem:[%s14 + $0x8] sm:$0xff]
  %1570 = vset.pattern.permute.xlu0 0
  %1571 = vperm.xlu0 %1570, %v1567
  %v1572 = vpop.permute.xlu0 %1571
  %1575 = vset.pattern.permute.xlu0 0
  %1576 = vperm.xlu0 %1575, %v1568
  %v1577 = vpop.permute.xlu0 %1576
  %v1579 = vadd.f32 %v1565, %v1572
  %v1580 = vadd.f32 %v1566, %v1577
  %vm1581 = vcmask 15360
  %1582 = vst.msk [vmem:[%s15] sm:$0xff] %vm1581, %v1579
  %1583 = vst.msk [vmem:[%s15 + $0x8] sm:$0xff] %vm1581, %v1580
  // Predicated region
  $region62: #{active_learning_forward.1} parent=0 // pred_check
    _
  $region63: #{active_learning_forward.1} parent=0 // pred_check_branch
    %1585 = sbr.rel (0) target = $region65
  $region64: #{active_learning_forward.1} parent=0 // pred_region
    _
  $region65: #{active_learning_forward.1} parent=0 // pred_fallthru
    _
  // Predicated region
  $region66: #{active_learning_forward.1} parent=0 // pred_check
    _
  $region67: #{active_learning_forward.1} parent=0 // pred_check_branch
    %1587 = sbr.rel (0) target = $region69
  $region68: #{active_learning_forward.1} parent=0 // pred_region
    _
  $region69: #{active_learning_forward.1} parent=0 // pred_fallthru
    _

</llo_original>
